<compile_context>
chip_gen: v5e
topology: v5e:2x2
jax: 0.10.0
libtpu: 0.0.40
codegen_flags: <defaults>
</compile_context>

<pallas_src>
import functools

import jax
import jax.numpy as jnp
import numpy as np
from jax.experimental import pallas as pl
from jax.experimental.pallas import tpu as pltpu

# ---- small shapes consistent with the module (hidden_size 768 -> 32 for demo) ----
B, T = 2, 8
H = 32                 # stands in for hidden_size=768
NUM_LAYERS = 12        # BERT-base layer count -> 13 hidden states (embeddings + 12)
NUM_HEADS = 4
FFN = 64
VOCAB = 100
MAX_POS = 16
NUM_HIDDEN_STATES = NUM_LAYERS + 1   # 13
NUM_DROPOUTS = 5

# h = f/5; h = (h+f)/5 repeated 4x  ==>  h = f * sum_{k=1..5} (1/5)^k   (dropout = id)
DROPOUT_SCALE = float(sum((1.0 / NUM_DROPOUTS) ** k for k in range(1, NUM_DROPOUTS + 1)))


# ----------------------------- Pallas head kernels -----------------------------
def _stage1_kernel(ht_ref, fcw_ref, s_ref, g_ref):
    """Per-batch-block single HBM pass over ht_cls.

    ht_ref : VMEM [L, TB, H]  (bf16) CLS reps of the 13 hidden states, one batch tile
    fcw_ref: VMEM [1, H]      (f32)  fc weight row
    s_ref  : VMEM [L, TB]     (f32)  per-example layer sums   sum_h ht[l,b,h]
    g_ref  : VMEM [L, TB]     (f32)  per-example fc proj      <ht[l,b,:], fc_w>
    """
    ht = ht_ref[...].astype(jnp.float32)                 # f32 accumulation (bf16 load)
    fcw = fcw_ref[...]                                   # [1, H]
    # TODO(synk): fuse the two H-axis reduces into one VMEM traversal (shared vld) for
    # v7x, where the second sweep starts to contend for vld/XLU slots; on v5e/v6e the
    # extra sweep is fully hidden under the HBM DMA.
    s_ref[...] = jnp.sum(ht, axis=2)                     # [L, TB] lane reduce over H
    g_ref[...] = jnp.sum(ht * fcw[None, :, :], axis=2)   # [L, TB] lane reduce over H


def _stage2_kernel(s_ref, w_ref, g_ref, fcb_ref, out_ref):
    """Whole-batch softmax + layer contraction (trivially cheap).

    s_ref  : VMEM [L, Bp]  per-example layer sums over the whole (padded) batch
    w_ref  : VMEM [L, 1]   self.weights (torch.rand(13, 1))
    g_ref  : VMEM [L, TB]  per-example fc projections, one batch tile
    fcb_ref: VMEM [1, 1]   fc bias
    out_ref: VMEM [1, TB]  h (lane-dense over the batch)
    """
    # (1) whole-batch layer-attention logits (zero-padded rows contribute nothing).
    layer_sums = jnp.sum(s_ref[...], axis=1, keepdims=True)   # [L, 1]
    logits = layer_sums * w_ref[...]                           # [L, 1]
    # (2) exact 13-way softmax (max / exp / sum / divide — no approx reciprocal).
    m = jnp.max(logits, axis=0, keepdims=True)                 # [1, 1]
    e = jnp.exp(logits - m)                                    # [L, 1]
    a = e / jnp.sum(e, axis=0, keepdims=True)                  # [L, 1]
    # (3) fc was applied before the layer contraction (linearity), so the remaining
    #     work is a single sublane contraction over L -> lane-dense [1, TB].
    proj = jnp.sum(g_ref[...] * a, axis=0, keepdims=True)      # [1, TB]
    out_ref[...] = (proj + fcb_ref[...]) * DROPOUT_SCALE


@functools.partial(jax.jit, static_argnames=("block_b",))
def disaster_head(ht_cls, layer_w, fc_w, fc_b, *, block_b=128):
    """Classifier head of DisasterClassifier, batch-blocked, single HBM pass."""
    l, b, h_dim = ht_cls.shape
    nb = -(-b // block_b)                 # number of batch tiles
    bp = nb * block_b                     # padded batch (multiple of 128 -> unmasked vst)
    if bp != b:
        ht_cls = jnp.pad(ht_cls, ((0, 0), (0, bp - b), (0, 0)))   # zeros: no effect on sums

    fc_w = fc_w.astype(jnp.float32).reshape(1, h_dim)
    layer_w = layer_w.astype(jnp.float32).reshape(l, 1)
    fc_b2 = fc_b.astype(jnp.float32).reshape(1, 1)

    # Raise the scoped-VMEM limit only when the chosen tile needs it (big v6e tiles).
    itemsize = jnp.dtype(ht_cls.dtype).itemsize
    ht_block = l * block_b * h_dim * itemsize
    f32_work = l * block_b * h_dim * 4
    out_block = 2 * l * block_b * 4
    needed = 2 * (ht_block + out_block) + f32_work + (4 << 20)
    vmem_limit = None if needed <= (32 << 20) else min(int(needed), 64 << 20)

    # ---- stage 1: one pass over ht_cls, per-block lane-dense partials ----
    s, g = pl.pallas_call(
        _stage1_kernel,
        grid=(nb,),
        out_shape=(jax.ShapeDtypeStruct((l, bp), jnp.float32),
                   jax.ShapeDtypeStruct((l, bp), jnp.float32)),
        in_specs=[
            pl.BlockSpec((l, block_b, h_dim), lambda i: (0, i, 0)),   # ht_cls tile
            pl.BlockSpec((1, h_dim), lambda i: (0, 0)),               # fc weight row
        ],
        out_specs=[
            pl.BlockSpec((l, block_b), lambda i: (0, i)),             # s (layer sums)
            pl.BlockSpec((l, block_b), lambda i: (0, i)),             # g (fc proj)
        ],
        compiler_params=pltpu.CompilerParams(
            dimension_semantics=("parallel",),
            vmem_limit_bytes=vmem_limit),
    )(ht_cls, fc_w)

    # ---- stage 2: whole-batch softmax + contraction (tiny) ----
    out = pl.pallas_call(
        _stage2_kernel,
        grid=(nb,),
        out_shape=jax.ShapeDtypeStruct((1, bp), jnp.float32),
        in_specs=[
            pl.BlockSpec((l, bp), lambda i: (0, 0)),                  # s, full (tiny)
            pl.BlockSpec((l, 1), lambda i: (0, 0)),                   # layer weights
            pl.BlockSpec((l, block_b), lambda i: (0, i)),             # g tile
            pl.BlockSpec((1, 1), lambda i: (0, 0)),                   # fc bias
        ],
        out_specs=pl.BlockSpec((1, block_b), lambda i: (0, i)),
        compiler_params=pltpu.CompilerParams(dimension_semantics=("parallel",)),
    )(s, layer_w, g, fc_b2)

    # Match torch output shape [B, num_class-1] = [B, 1]; drop batch padding.
    return out[0, :b].reshape(b, 1)


# ------------------------- synthetic BERT backbone (glue) -------------------------
def _layer_norm(x, g, b, eps=1e-12):
    mu = jnp.mean(x, axis=-1, keepdims=True)
    var = jnp.mean((x - mu) ** 2, axis=-1, keepdims=True)
    return (x - mu) * jax.lax.rsqrt(var + eps) * g + b


def init_params(key):
    def lin(k, din, dout, scale=0.02):
        return (scale * jax.random.normal(k, (din, dout), jnp.float32),
                jnp.zeros((dout,), jnp.float32))

    keys = jax.random.split(key, 6)
    params = {
        "tok_emb": 0.02 * jax.random.normal(keys[0], (VOCAB, H), jnp.float32),
        "pos_emb": 0.02 * jax.random.normal(keys[1], (MAX_POS, H), jnp.float32),
        "emb_ln": (jnp.ones((H,), jnp.float32), jnp.zeros((H,), jnp.float32)),
        "layers": [],
    }
    for lk in jax.random.split(keys[2], NUM_LAYERS):
        ks = jax.random.split(lk, 6)
        params["layers"].append({
            "q": lin(ks[0], H, H), "k": lin(ks[1], H, H),
            "v": lin(ks[2], H, H), "o": lin(ks[3], H, H),
            "ln1": (jnp.ones((H,), jnp.float32), jnp.zeros((H,), jnp.float32)),
            "f1": lin(ks[4], H, FFN), "f2": lin(ks[5], FFN, H),
            "ln2": (jnp.ones((H,), jnp.float32), jnp.zeros((H,), jnp.float32)),
        })
    # DisasterClassifier's own parameters
    bound = 1.0 / np.sqrt(H)
    params["cls_weights"] = jax.random.uniform(
        keys[3], (NUM_HIDDEN_STATES, 1), jnp.float32)                  # torch.rand(13, 1)
    params["fc_w"] = jax.random.uniform(
        keys[4], (1, H), jnp.float32, minval=-bound, maxval=bound)     # nn.Linear(H, 1).weight
    params["fc_b"] = jax.random.uniform(
        keys[5], (1,), jnp.float32, minval=-bound, maxval=bound)       # nn.Linear(H, 1).bias
    return params


# TODO(synk): the pretrained 'bert-base-uncased' backbone cannot be reproduced from the
# module definition alone; it is replaced here by a deterministic synthetic BERT-style
# encoder (plain JAX glue) that produces the 13 hidden states the Pallas head consumes.
def bert_encoder(params, seq, attn_mask):
    b, t = seq.shape
    x = params["tok_emb"][seq] + params["pos_emb"][:t][None, :, :]
    x = _layer_norm(x, *params["emb_ln"])
    hidden_states = [x]
    mask_bias = (1.0 - attn_mask.astype(jnp.float32))[:, None, None, :] * -1e9
    dh = H // NUM_HEADS
    for lp in params["layers"]:
        def proj(wb, y):
            return y @ wb[0] + wb[1]

        def split_heads(y):
            return y.reshape(b, t, NUM_HEADS, dh).transpose(0, 2, 1, 3)

        q, k, v = (split_heads(proj(lp[n], x)) for n in ("q", "k", "v"))
        scores = jnp.einsum("bhqd,bhkd->bhqk", q, k) / np.sqrt(dh) + mask_bias
        attn = jax.nn.softmax(scores, axis=-1)
        ctx = jnp.einsum("bhqk,bhkd->bhqd", attn, v)
        ctx = ctx.transpose(0, 2, 1, 3).reshape(b, t, H)
        x = _layer_norm(x + proj(lp["o"], ctx), *lp["ln1"])
        ff = proj(lp["f2"], jax.nn.gelu(proj(lp["f1"], x)))
        x = _layer_norm(x + ff, *lp["ln2"])
        hidden_states.append(x)
    return hidden_states


def disaster_classifier_forward(params, seq, attn_masks, *, block_b=128):
    hidden_states = bert_encoder(params, seq, attn_masks)
    # torch.cat(cont_reps)[:, :1, :].view(13, B, 1, 768): CLS token of every hidden state.
    # Carried in bf16 (HBM-bound head); the kernel accumulates in f32.
    ht_cls = jnp.stack([hs[:, 0, :] for hs in hidden_states], axis=0).astype(jnp.bfloat16)
    h = disaster_head(ht_cls, params["cls_weights"], params["fc_w"], params["fc_b"],
                      block_b=block_b)
    return h, ht_cls


# ----------------------------- pure-JAX reference head -----------------------------
def head_reference(ht_cls, layer_w, fc_w_row, fc_b):
    ht = ht_cls.astype(jnp.float32)
    L = ht.shape[0]
    atten = jnp.sum(ht * layer_w.reshape(L, 1, 1), axis=(1, 2))     # [13]
    atten = jax.nn.softmax(atten, axis=0)
    feature = jnp.sum(ht * atten.reshape(L, 1, 1), axis=0)          # [B, H]
    f = feature @ fc_w_row.T + fc_b                                 # [B, 1]
    h = f / float(NUM_DROPOUTS)
    for _ in range(NUM_DROPOUTS - 1):
        h = (h + f) / float(NUM_DROPOUTS)
    return h


if __name__ == "__main__":
    root = jax.random.PRNGKey(0)
    pkey, skey, hkey = jax.random.split(root, 3)
    params = init_params(pkey)

    seq = jax.random.randint(skey, (B, T), 0, VOCAB, dtype=jnp.int32)
    attn_masks = jnp.concatenate(
        [jnp.ones((B, T - 2), jnp.int32), jnp.zeros((B, 2), jnp.int32)], axis=1)

    # Full forward at the small demo shapes (single batch tile after padding).
    h, ht_cls = disaster_classifier_forward(params, seq, attn_masks)
    h = jax.block_until_ready(h)
    assert h.shape == (B, 1)
    ref = head_reference(ht_cls, params["cls_weights"], params["fc_w"], params["fc_b"])
    np.testing.assert_allclose(np.asarray(h), np.asarray(ref), rtol=5e-4, atol=1e-5)

    # Multi-block path: B=300 pads to 384 = 3 batch tiles of 128 — exercises the
    # blocked grid, zero-padding, and the whole-batch softmax combined across blocks.
    ht_big = (0.1 * jax.random.normal(
        hkey, (NUM_HIDDEN_STATES, 300, H), jnp.float32)).astype(jnp.bfloat16)
    h_big = disaster_head(ht_big, params["cls_weights"], params["fc_w"], params["fc_b"],
                          block_b=128)
    h_big = jax.block_until_ready(h_big)
    assert h_big.shape == (300, 1)
    ref_big = head_reference(ht_big, params["cls_weights"], params["fc_w"], params["fc_b"])
    np.testing.assert_allclose(np.asarray(h_big), np.asarray(ref_big), rtol=5e-4, atol=1e-5)

    print("KERNEL_OK")
</pallas_src>

<mosaic_0001>
module attributes {stable_mosaic.version = 11 : i64} {
  func.func @_stage2_kernel(%arg0: i32, %arg1: memref<13x128xf32, #tpu.memory_space<vmem>>, %arg2: memref<13x1xf32, #tpu.memory_space<vmem>>, %arg3: memref<13x128xf32, #tpu.memory_space<vmem>>, %arg4: memref<1x1xf32, #tpu.memory_space<vmem>>, %arg5: memref<1x128xf32, #tpu.memory_space<vmem>>) attributes {dimension_semantics = [#tpu.dimension_semantics<parallel>], iteration_bounds = array<i64: 1>, scalar_prefetch = 0 : i64, scratch_operands = 0 : i64, tpu.core_type = #tpu.core_type<tc>, window_params = [{pipeline_mode = #tpu.pipeline_mode<synchronous>, transform_indices = @transform_0, window_bounds = array<i64: 13, 128>}, {pipeline_mode = #tpu.pipeline_mode<synchronous>, transform_indices = @transform_1, window_bounds = array<i64: 13, 1>}, {transform_indices = @transform_2, window_bounds = array<i64: 13, 128>}, {pipeline_mode = #tpu.pipeline_mode<synchronous>, transform_indices = @transform_3, window_bounds = array<i64: 1, 1>}, {transform_indices = @transform_4, window_bounds = array<i64: 1, 128>}]} {
    %c0 = arith.constant 0 : index
    %c0_0 = arith.constant 0 : index
    %0 = vector.load %arg1[%c0, %c0_0] : memref<13x128xf32, #tpu.memory_space<vmem>>, vector<13x128xf32>
    %cst = arith.constant dense<0.000000e+00> : vector<13xf32>
    %1 = vector.multi_reduction <add>, %0, %cst [1] : vector<13x128xf32> to vector<13xf32>
    %2 = vector.shape_cast %1 : vector<13xf32> to vector<13x1xf32>
    %c0_1 = arith.constant 0 : index
    %c0_2 = arith.constant 0 : index
    %3 = vector.load %arg2[%c0_1, %c0_2] : memref<13x1xf32, #tpu.memory_space<vmem>>, vector<13x1xf32>
    %4 = arith.mulf %2, %3 : vector<13x1xf32>
    %cst_3 = arith.constant dense<0xFF800000> : vector<1xf32>
    %5 = vector.multi_reduction <maximumf>, %4, %cst_3 [0] : vector<13x1xf32> to vector<1xf32>
    %6 = vector.shape_cast %5 : vector<1xf32> to vector<1x1xf32>
    %7 = vector.broadcast %6 : vector<1x1xf32> to vector<13x1xf32>
    %8 = arith.subf %4, %7 : vector<13x1xf32>
    %9 = math.exp %8 : vector<13x1xf32>
    %cst_4 = arith.constant dense<0.000000e+00> : vector<1xf32>
    %10 = vector.multi_reduction <add>, %9, %cst_4 [0] : vector<13x1xf32> to vector<1xf32>
    %11 = vector.shape_cast %10 : vector<1xf32> to vector<1x1xf32>
    %12 = vector.broadcast %11 : vector<1x1xf32> to vector<13x1xf32>
    %13 = arith.divf %9, %12 : vector<13x1xf32>
    %c0_5 = arith.constant 0 : index
    %c0_6 = arith.constant 0 : index
    %14 = vector.load %arg3[%c0_5, %c0_6] : memref<13x128xf32, #tpu.memory_space<vmem>>, vector<13x128xf32>
    %15 = vector.broadcast %13 : vector<13x1xf32> to vector<13x128xf32>
    %16 = arith.mulf %14, %15 : vector<13x128xf32>
    %cst_7 = arith.constant dense<0.000000e+00> : vector<128xf32>
    %17 = vector.multi_reduction <add>, %16, %cst_7 [0] : vector<13x128xf32> to vector<128xf32>
    %18 = vector.shape_cast %17 : vector<128xf32> to vector<1x128xf32>
    %c0_8 = arith.constant 0 : index
    %c0_9 = arith.constant 0 : index
    %19 = vector.load %arg4[%c0_8, %c0_9] : memref<1x1xf32, #tpu.memory_space<vmem>>, vector<1x1xf32>
    %20 = vector.broadcast %19 : vector<1x1xf32> to vector<1x128xf32>
    %21 = arith.addf %18, %20 : vector<1x128xf32>
    %cst_10 = arith.constant 2.499200e-01 : f32
    %22 = vector.broadcast %cst_10 : f32 to vector<1x128xf32>
    %23 = arith.mulf %21, %22 : vector<1x128xf32>
    %c0_11 = arith.constant 0 : index
    %c0_12 = arith.constant 0 : index
    %24 = vector.load %arg5[%c0_11, %c0_12] : memref<1x128xf32, #tpu.memory_space<vmem>>, vector<1x128xf32>
    tpu.vector_store %arg5[%c0_11, %c0_12], %23 {strides = array<i32>} : memref<1x128xf32, #tpu.memory_space<vmem>>, vector<1x128xf32>,
    return
  }
  func.func @transform_0(%arg0: i32) -> (i32, i32) {
    %c0_i32 = arith.constant 0 : i32
    %c0_i32_0 = arith.constant 0 : i32
    %c0_i32_1 = arith.constant 0 : i32
    return %c0_i32, %c0_i32_0 : i32, i32
  }
  func.func @transform_1(%arg0: i32) -> (i32, i32) {
    %c0_i32 = arith.constant 0 : i32
    %c0_i32_0 = arith.constant 0 : i32
    %c0_i32_1 = arith.constant 0 : i32
    return %c0_i32, %c0_i32_0 : i32, i32
  }
  func.func @transform_2(%arg0: i32) -> (i32, i32) {
    %c0_i32 = arith.constant 0 : i32
    %c0_i32_0 = arith.constant 0 : i32
    return %c0_i32, %arg0 : i32, i32
  }
  func.func @transform_3(%arg0: i32) -> (i32, i32) {
    %c0_i32 = arith.constant 0 : i32
    %c0_i32_0 = arith.constant 0 : i32
    %c0_i32_1 = arith.constant 0 : i32
    return %c0_i32, %c0_i32_0 : i32, i32
  }
  func.func @transform_4(%arg0: i32) -> (i32, i32) {
    %c0_i32 = arith.constant 0 : i32
    %c0_i32_0 = arith.constant 0 : i32
    return %c0_i32, %arg0 : i32, i32
  }
}

module attributes {stable_mosaic.version = 11 : i64} {
  func.func @_stage1_kernel(%arg0: i32, %arg1: memref<13x128x32xbf16, #tpu.memory_space<vmem>>, %arg2: memref<1x32xf32, #tpu.memory_space<vmem>>, %arg3: memref<13x128xf32, #tpu.memory_space<vmem>>, %arg4: memref<13x128xf32, #tpu.memory_space<vmem>>) attributes {dimension_semantics = [#tpu.dimension_semantics<parallel>], iteration_bounds = array<i64: 1>, scalar_prefetch = 0 : i64, scratch_operands = 0 : i64, tpu.core_type = #tpu.core_type<tc>, window_params = [{transform_indices = @transform_0, window_bounds = array<i64: 13, 128, 32>}, {pipeline_mode = #tpu.pipeline_mode<synchronous>, transform_indices = @transform_1, window_bounds = array<i64: 1, 32>}, {transform_indices = @transform_2, window_bounds = array<i64: 13, 128>}, {transform_indices = @transform_3, window_bounds = array<i64: 13, 128>}]} {
    %c0 = arith.constant 0 : index
    %c0_0 = arith.constant 0 : index
    %c0_1 = arith.constant 0 : index
    %0 = vector.load %arg1[%c0, %c0_0, %c0_1] : memref<13x128x32xbf16, #tpu.memory_space<vmem>>, vector<13x128x32xbf16>
    %1 = arith.extf %0 : vector<13x128x32xbf16> to vector<13x128x32xf32>
    %c0_2 = arith.constant 0 : index
    %c0_3 = arith.constant 0 : index
    %2 = vector.load %arg2[%c0_2, %c0_3] : memref<1x32xf32, #tpu.memory_space<vmem>>, vector<1x32xf32>
    %cst = arith.constant dense<0.000000e+00> : vector<13x128xf32>
    %3 = vector.multi_reduction <add>, %1, %cst [2] : vector<13x128x32xf32> to vector<13x128xf32>
    %c0_4 = arith.constant 0 : index
    %c0_5 = arith.constant 0 : index
    %4 = vector.load %arg3[%c0_4, %c0_5] : memref<13x128xf32, #tpu.memory_space<vmem>>, vector<13x128xf32>
    tpu.vector_store %arg3[%c0_4, %c0_5], %3 {strides = array<i32>} : memref<13x128xf32, #tpu.memory_space<vmem>>, vector<13x128xf32>,
    %5 = vector.shape_cast %2 : vector<1x32xf32> to vector<1x1x32xf32>
    %6 = vector.broadcast %5 : vector<1x1x32xf32> to vector<13x128x32xf32>
    %7 = arith.mulf %1, %6 : vector<13x128x32xf32>
    %cst_6 = arith.constant dense<0.000000e+00> : vector<13x128xf32>
    %8 = vector.multi_reduction <add>, %7, %cst_6 [2] : vector<13x128x32xf32> to vector<13x128xf32>
    %c0_7 = arith.constant 0 : index
    %c0_8 = arith.constant 0 : index
    %9 = vector.load %arg4[%c0_7, %c0_8] : memref<13x128xf32, #tpu.memory_space<vmem>>, vector<13x128xf32>
    tpu.vector_store %arg4[%c0_7, %c0_8], %8 {strides = array<i32>} : memref<13x128xf32, #tpu.memory_space<vmem>>, vector<13x128xf32>,
    return
  }
  func.func @transform_0(%arg0: i32) -> (i32, i32, i32) {
    %c0_i32 = arith.constant 0 : i32
    %c0_i32_0 = arith.constant 0 : i32
    %c0_i32_1 = arith.constant 0 : i32
    return %c0_i32, %arg0, %c0_i32_0 : i32, i32, i32
  }
  func.func @transform_1(%arg0: i32) -> (i32, i32) {
    %c0_i32 = arith.constant 0 : i32
    %c0_i32_0 = arith.constant 0 : i32
    %c0_i32_1 = arith.constant 0 : i32
    return %c0_i32, %c0_i32_0 : i32, i32
  }
  func.func @transform_2(%arg0: i32) -> (i32, i32) {
    %c0_i32 = arith.constant 0 : i32
    %c0_i32_0 = arith.constant 0 : i32
    return %c0_i32, %arg0 : i32, i32
  }
  func.func @transform_3(%arg0: i32) -> (i32, i32) {
    %c0_i32 = arith.constant 0 : i32
    %c0_i32_0 = arith.constant 0 : i32
    return %c0_i32, %arg0 : i32, i32
  }
}

</mosaic_0001>

<llo_original>
// kernel: disaster_head.3
$region0: #{disaster_head.3}
  #allocation0 [shape = 'u32[]', space=smem, size = 0x4, offset = 0x4, fixed_abs, tag = 'smem constant byte address 0x4 - core index']
  #allocation1 [shape = 'u32[72,128]{1,0:T(1,128)}', space=vmem, size = 0x9000, scoped, tag = 'internal scratch']
  #allocation2 [shape = 'f32[1,1]{1,0:T(1,128)S(1)}', space=vmem, size = 0x200, scoped, tag = 'scoped memory for disaster_head.3']
  %s0 = inlined_call_operand.vmem [shape: f32[13,128], index: 0, kind: input, shape index: {}]
  %s1 = inlined_call_operand.vmem [shape: f32[13,1], index: 1, kind: input, shape index: {}]
  %s2 = inlined_call_operand.vmem [shape: f32[13,128], index: 2, kind: input, shape index: {}]
  %s3 = inlined_call_operand.<no memory space> [shape: f32[1,1], index: 3, kind: input, shape index: {}]
  %s4 = inlined_call_operand.vmem [shape: f32[1,128], index: 4, kind: output, shape index: {}]
  %s5 = sld [smem:[#allocation0]]
  $region26: #{disaster_head.3} parent=0
    _
  %s7 = ssub.s32 1, %s5
  %s8 = scalar_select 0, %s7, %s5
  %v9 = vstv %s3
  %10 = vst [vmem:[#allocation2] sm:$0x1] %v9
  // Predicated region
  $region2: #{disaster_head.3} parent=0 // pred_check
    _
  $region3: #{disaster_head.3} parent=0 // pred_check_branch
    %12 = sbr.rel (0) target = $region5
  $region4: #{disaster_head.3} parent=0 // pred_region
    _
  $region5: #{disaster_head.3} parent=0 // pred_fallthru
    _
  // Predicated region
  $region6: #{disaster_head.3} parent=0 // pred_check
    _
  $region7: #{disaster_head.3} parent=0 // pred_check_branch
    %14 = sbr.rel (0) target = $region9
  $region8: #{disaster_head.3} parent=0 // pred_region
    _
  $region9: #{disaster_head.3} parent=0 // pred_fallthru
    _
  // Predicated region
  $region10: #{disaster_head.3} parent=0 // pred_check
    _
  $region11: #{disaster_head.3} parent=0 // pred_check_branch
    %16 = sbr.rel (0) target = $region13
  $region12: #{disaster_head.3} parent=0 // pred_region
    _
  $region13: #{disaster_head.3} parent=0 // pred_fallthru
    _
  // Predicated region
  $region14: #{disaster_head.3} parent=0 // pred_check
    _
  $region15: #{disaster_head.3} parent=0 // pred_check_branch
    %18 = sbr.rel (0) target = $region17
  $region16: #{disaster_head.3} parent=0 // pred_region
    _
  $region17: #{disaster_head.3} parent=0 // pred_fallthru
    _
  %v19 = vld [vmem:[%s0] sm:$0xff]
  %v20 = vld [vmem:[%s0 + $0x8] sm:$0x1f]
  %21 = vadd.xlane.f32.xlu0 %v19
  %v22 = vpop.xlane.xlu0 %21
  %vm23 = vcmask 1044480
  %v24 = vsel %vm23, %v20, 0.0
  %25 = vadd.xlane.f32.xlu0 %v24
  %v26 = vpop.xlane.xlu0 %25
  %v27 = vld [vmem:[%s1] sm:$0xff]
  %v28 = vld [vmem:[%s1 + $0x8] sm:$0x1f]
  %v29 = vmul.f32 %v22, %v27
  %v30 = vmul.f32 %v26, %v28
  %vm31 = vcmask 7168
  %v32 = vsel %vm31, %v29, -inf
  %vm33 = vcmask 4096
  %v34 = vsel %vm33, %v30, -inf
  %v35 = vmax.f32 %v32, %v34
  %v36 = vrot.slane %v35, 4
  %v37 = vmax.f32 %v35, %v36
  %v38 = vrot.slane %v37, 2
  %v39 = vmax.f32 %v37, %v38
  %v40 = vrot.slane %v39, 1
  %v41 = vmax.f32 %v39, %v40
  %v42 = vsub.f32 %v29, %v41
  %v43 = vsub.f32 %v30, %v41
  %v44 = vmul.f32 %v42, 1.442695
  %v45 = vpow.pop %v44
  %v46 = vmul.f32 %v43, 1.442695
  %v47 = vpow.pop %v46
  %v48 = vsel %vm31, %v45, 0.0
  %v49 = vsel %vm33, %v47, 0.0
  %v50 = vadd.f32 %v48, %v49
  %v51 = vrot.slane %v50, 4
  %v52 = vadd.f32 %v50, %v51
  %v53 = vrot.slane %v52, 2
  %v54 = vadd.f32 %v52, %v53
  %v55 = vrot.slane %v54, 1
  %v56 = vadd.f32 %v54, %v55
  %v57 = vrcp.pop %v56
  %v58 = vmul.f32 %v56, %v57
  %v59 = vsub.f32 1.0, %v58
  %v60 = vmul.f32 %v57, %v59
  %v61 = vadd.f32 %v57, %v60
  %vm62 = vweird.f32 %v56
  %vm63 = vweird.f32 %v57
  %vm64 = vmor %vm62, %vm63
  %v65 = vsel %vm64, %v57, %v61
  %v66 = vand.u32 2147483647, %v56
  %vm67 = vcmp.eq.f32.partialorder %v66, 8.507059e+37
  %v68 = vand.u32 %v56, 2147483648
  %v69 = vor.u32 1.1754944e-38, %v68
  %v70 = vsel %vm67, %v69, %v65
  %v71 = vmul.f32 %v45, %v70
  %v72 = vmul.f32 %v47, %v70
  %v73 = vld [vmem:[%s2] sm:$0xff]
  %v74 = vld [vmem:[%s2 + $0x8] sm:$0x1f]
  %76 = vset.pattern.permute.xlu0 0
  %77 = vperm.xlu0 %76, %v71
  %v78 = vpop.permute.xlu0 %77
  %81 = vset.pattern.permute.xlu0 0
  %82 = vperm.xlu0 %81, %v72
  %v83 = vpop.permute.xlu0 %82
  %v85 = vmul.f32 %v73, %v78
  %v86 = vmul.f32 %v74, %v83
  %v87 = vsel %vm23, %v86, 0.0
  %v88 = vadd.f32 %v85, %v87
  %v89 = vrot.slane %v88, 4
  %v90 = vadd.f32 %v88, %v89
  %v91 = vrot.slane %v90, 2
  %v92 = vadd.f32 %v90, %v91
  %v93 = vrot.slane %v92, 1
  %v94 = vadd.f32 %v92, %v93
  %v95 = vld [vmem:[#allocation2] sm:$0x1]
  %97 = vset.pattern.permute.xlu0 0
  %98 = vperm.xlu0 %97, %v95
  %v99 = vpop.permute.xlu0 %98
  %v101 = vperm.slane %v99, 0
  %v102 = vadd.f32 %v94, %v101
  %v103 = vmul.f32 %v102, 0.24992
  %104 = vst [vmem:[%s4] sm:$0x1] %v103
  // Predicated region
  $region18: #{disaster_head.3} parent=0 // pred_check
    _
  $region19: #{disaster_head.3} parent=0 // pred_check_branch
    %106 = sbr.rel (0) target = $region21
  $region20: #{disaster_head.3} parent=0 // pred_region
    _
  $region21: #{disaster_head.3} parent=0 // pred_fallthru
    _
  // Predicated region
  $region22: #{disaster_head.3} parent=0 // pred_check
    _
  $region23: #{disaster_head.3} parent=0 // pred_check_branch
    %108 = sbr.rel (0) target = $region25
  $region24: #{disaster_head.3} parent=0 // pred_region
    _
  $region25: #{disaster_head.3} parent=0 // pred_fallthru
    _

// kernel: disaster_head.2
$region0: #{disaster_head.2}
  #allocation0 [shape = 'u32[]', space=smem, size = 0x4, offset = 0x4, fixed_abs, tag = 'smem constant byte address 0x4 - core index']
  #allocation1 [shape = 'u32[72,128]{1,0:T(1,128)}', space=vmem, size = 0x9000, scoped, tag = 'internal scratch']
  %s0 = inlined_call_operand.vmem [shape: bf16[13,128,32], index: 0, kind: input, shape index: {}]
  %s1 = inlined_call_operand.vmem [shape: f32[1,32], index: 1, kind: input, shape index: {}]
  %s2 = inlined_call_operand.vmem [shape: f32[13,128], index: 2, kind: output, shape index: {0}]
  %s3 = inlined_call_operand.vmem [shape: f32[13,128], index: 3, kind: output, shape index: {1}]
  %4 = xla_tuple %s2, %s3
  %s5 = sld [smem:[#allocation0]]
  $region26: #{disaster_head.2} parent=0
    _
  %s7 = ssub.s32 1, %s5
  %s8 = scalar_select 0, %s7, %s5
  // Predicated region
  $region2: #{disaster_head.2} parent=0 // pred_check
    _
  $region3: #{disaster_head.2} parent=0 // pred_check_branch
    %10 = sbr.rel (0) target = $region5
  $region4: #{disaster_head.2} parent=0 // pred_region
    _
  $region5: #{disaster_head.2} parent=0 // pred_fallthru
    _
  // Predicated region
  $region6: #{disaster_head.2} parent=0 // pred_check
    _
  $region7: #{disaster_head.2} parent=0 // pred_check_branch
    %12 = sbr.rel (0) target = $region9
  $region8: #{disaster_head.2} parent=0 // pred_region
    _
  $region9: #{disaster_head.2} parent=0 // pred_fallthru
    _
  %v13 = vld [vmem:[%s0] sm:$0xf]
  %v14 = vld [vmem:[%s0 + $0x4] sm:$0xf]
  %v15 = vld [vmem:[%s0 + $0x8] sm:$0xf]
  %v16 = vld [vmem:[%s0 + $0xc] sm:$0xf]
  %v17 = vld [vmem:[%s0 + $0x10] sm:$0xf]
  %v18 = vld [vmem:[%s0 + $0x14] sm:$0xf]
  %v19 = vld [vmem:[%s0 + $0x18] sm:$0xf]
  %v20 = vld [vmem:[%s0 + $0x1c] sm:$0xf]
  %v21 = vld [vmem:[%s0 + $0x20] sm:$0xf]
  %v22 = vld [vmem:[%s0 + $0x24] sm:$0xf]
  %v23 = vld [vmem:[%s0 + $0x28] sm:$0xf]
  %v24 = vld [vmem:[%s0 + $0x2c] sm:$0xf]
  %v25 = vld [vmem:[%s0 + $0x30] sm:$0xf]
  %v26 = vld [vmem:[%s0 + $0x34] sm:$0xf]
  %v27 = vld [vmem:[%s0 + $0x38] sm:$0xf]
  %v28 = vld [vmem:[%s0 + $0x3c] sm:$0xf]
  %v29 = vld [vmem:[%s0 + $0x40] sm:$0xf]
  %v30 = vld [vmem:[%s0 + $0x44] sm:$0xf]
  %v31 = vld [vmem:[%s0 + $0x48] sm:$0xf]
  %v32 = vld [vmem:[%s0 + $0x4c] sm:$0xf]
  %v33 = vld [vmem:[%s0 + $0x50] sm:$0xf]
  %v34 = vld [vmem:[%s0 + $0x54] sm:$0xf]
  %v35 = vld [vmem:[%s0 + $0x58] sm:$0xf]
  %v36 = vld [vmem:[%s0 + $0x5c] sm:$0xf]
  %v37 = vld [vmem:[%s0 + $0x60] sm:$0xf]
  %v38 = vld [vmem:[%s0 + $0x64] sm:$0xf]
  %v39 = vld [vmem:[%s0 + $0x68] sm:$0xf]
  %v40 = vld [vmem:[%s0 + $0x6c] sm:$0xf]
  %v41 = vld [vmem:[%s0 + $0x70] sm:$0xf]
  %v42 = vld [vmem:[%s0 + $0x74] sm:$0xf]
  %v43 = vld [vmem:[%s0 + $0x78] sm:$0xf]
  %v44 = vld [vmem:[%s0 + $0x7c] sm:$0xf]
  %v45 = vld [vmem:[%s0 + $0x80] sm:$0xf]
  %v46 = vld [vmem:[%s0 + $0x84] sm:$0xf]
  %v47 = vld [vmem:[%s0 + $0x88] sm:$0xf]
  %v48 = vld [vmem:[%s0 + $0x8c] sm:$0xf]
  %v49 = vld [vmem:[%s0 + $0x90] sm:$0xf]
  %v50 = vld [vmem:[%s0 + $0x94] sm:$0xf]
  %v51 = vld [vmem:[%s0 + $0x98] sm:$0xf]
  %v52 = vld [vmem:[%s0 + $0x9c] sm:$0xf]
  %v53 = vld [vmem:[%s0 + $0xa0] sm:$0xf]
  %v54 = vld [vmem:[%s0 + $0xa4] sm:$0xf]
  %v55 = vld [vmem:[%s0 + $0xa8] sm:$0xf]
  %v56 = vld [vmem:[%s0 + $0xac] sm:$0xf]
  %v57 = vld [vmem:[%s0 + $0xb0] sm:$0xf]
  %v58 = vld [vmem:[%s0 + $0xb4] sm:$0xf]
  %v59 = vld [vmem:[%s0 + $0xb8] sm:$0xf]
  %v60 = vld [vmem:[%s0 + $0xbc] sm:$0xf]
  %v61 = vld [vmem:[%s0 + $0xc0] sm:$0xf]
  %v62 = vld [vmem:[%s0 + $0xc4] sm:$0xf]
  %v63 = vld [vmem:[%s0 + $0xc8] sm:$0xf]
  %v64 = vld [vmem:[%s0 + $0xcc] sm:$0xf]
  %v65 = vld [vmem:[%s0 + $0xd0] sm:$0xf]
  %v66 = vld [vmem:[%s0 + $0xd4] sm:$0xf]
  %v67 = vld [vmem:[%s0 + $0xd8] sm:$0xf]
  %v68 = vld [vmem:[%s0 + $0xdc] sm:$0xf]
  %v69 = vld [vmem:[%s0 + $0xe0] sm:$0xf]
  %v70 = vld [vmem:[%s0 + $0xe4] sm:$0xf]
  %v71 = vld [vmem:[%s0 + $0xe8] sm:$0xf]
  %v72 = vld [vmem:[%s0 + $0xec] sm:$0xf]
  %v73 = vld [vmem:[%s0 + $0xf0] sm:$0xf]
  %v74 = vld [vmem:[%s0 + $0xf4] sm:$0xf]
  %v75 = vld [vmem:[%s0 + $0xf8] sm:$0xf]
  %v76 = vld [vmem:[%s0 + $0xfc] sm:$0xf]
  %v77 = vld [vmem:[%s0 + $0x100] sm:$0xf]
  %v78 = vld [vmem:[%s0 + $0x104] sm:$0xf]
  %v79 = vld [vmem:[%s0 + $0x108] sm:$0xf]
  %v80 = vld [vmem:[%s0 + $0x10c] sm:$0xf]
  %v81 = vld [vmem:[%s0 + $0x110] sm:$0xf]
  %v82 = vld [vmem:[%s0 + $0x114] sm:$0xf]
  %v83 = vld [vmem:[%s0 + $0x118] sm:$0xf]
  %v84 = vld [vmem:[%s0 + $0x11c] sm:$0xf]
  %v85 = vld [vmem:[%s0 + $0x120] sm:$0xf]
  %v86 = vld [vmem:[%s0 + $0x124] sm:$0xf]
  %v87 = vld [vmem:[%s0 + $0x128] sm:$0xf]
  %v88 = vld [vmem:[%s0 + $0x12c] sm:$0xf]
  %v89 = vld [vmem:[%s0 + $0x130] sm:$0xf]
  %v90 = vld [vmem:[%s0 + $0x134] sm:$0xf]
  %v91 = vld [vmem:[%s0 + $0x138] sm:$0xf]
  %v92 = vld [vmem:[%s0 + $0x13c] sm:$0xf]
  %v93 = vld [vmem:[%s0 + $0x140] sm:$0xf]
  %v94 = vld [vmem:[%s0 + $0x144] sm:$0xf]
  %v95 = vld [vmem:[%s0 + $0x148] sm:$0xf]
  %v96 = vld [vmem:[%s0 + $0x14c] sm:$0xf]
  %v97 = vld [vmem:[%s0 + $0x150] sm:$0xf]
  %v98 = vld [vmem:[%s0 + $0x154] sm:$0xf]
  %v99 = vld [vmem:[%s0 + $0x158] sm:$0xf]
  %v100 = vld [vmem:[%s0 + $0x15c] sm:$0xf]
  %v101 = vld [vmem:[%s0 + $0x160] sm:$0xf]
  %v102 = vld [vmem:[%s0 + $0x164] sm:$0xf]
  %v103 = vld [vmem:[%s0 + $0x168] sm:$0xf]
  %v104 = vld [vmem:[%s0 + $0x16c] sm:$0xf]
  %v105 = vld [vmem:[%s0 + $0x170] sm:$0xf]
  %v106 = vld [vmem:[%s0 + $0x174] sm:$0xf]
  %v107 = vld [vmem:[%s0 + $0x178] sm:$0xf]
  %v108 = vld [vmem:[%s0 + $0x17c] sm:$0xf]
  %v109 = vld [vmem:[%s0 + $0x180] sm:$0xf]
  %v110 = vld [vmem:[%s0 + $0x184] sm:$0xf]
  %v111 = vld [vmem:[%s0 + $0x188] sm:$0xf]
  %v112 = vld [vmem:[%s0 + $0x18c] sm:$0xf]
  %v113 = vld [vmem:[%s0 + $0x190] sm:$0xf]
  %v114 = vld [vmem:[%s0 + $0x194] sm:$0xf]
  %v115 = vld [vmem:[%s0 + $0x198] sm:$0xf]
  %v116 = vld [vmem:[%s0 + $0x19c] sm:$0xf]
  %v117 = vld [vmem:[%s0 + $0x1a0] sm:$0xf]
  %v118 = vld [vmem:[%s0 + $0x1a4] sm:$0xf]
  %v119 = vld [vmem:[%s0 + $0x1a8] sm:$0xf]
  %v120 = vld [vmem:[%s0 + $0x1ac] sm:$0xf]
  %v121 = vld [vmem:[%s0 + $0x1b0] sm:$0xf]
  %v122 = vld [vmem:[%s0 + $0x1b4] sm:$0xf]
  %v123 = vld [vmem:[%s0 + $0x1b8] sm:$0xf]
  %v124 = vld [vmem:[%s0 + $0x1bc] sm:$0xf]
  %v125 = vld [vmem:[%s0 + $0x1c0] sm:$0xf]
  %v126 = vld [vmem:[%s0 + $0x1c4] sm:$0xf]
  %v127 = vld [vmem:[%s0 + $0x1c8] sm:$0xf]
  %v128 = vld [vmem:[%s0 + $0x1cc] sm:$0xf]
  %v129 = vld [vmem:[%s0 + $0x1d0] sm:$0xf]
  %v130 = vld [vmem:[%s0 + $0x1d4] sm:$0xf]
  %v131 = vld [vmem:[%s0 + $0x1d8] sm:$0xf]
  %v132 = vld [vmem:[%s0 + $0x1dc] sm:$0xf]
  %v133 = vld [vmem:[%s0 + $0x1e0] sm:$0xf]
  %v134 = vld [vmem:[%s0 + $0x1e4] sm:$0xf]
  %v135 = vld [vmem:[%s0 + $0x1e8] sm:$0xf]
  %v136 = vld [vmem:[%s0 + $0x1ec] sm:$0xf]
  %v137 = vld [vmem:[%s0 + $0x1f0] sm:$0xf]
  %v138 = vld [vmem:[%s0 + $0x1f4] sm:$0xf]
  %v139 = vld [vmem:[%s0 + $0x1f8] sm:$0xf]
  %v140 = vld [vmem:[%s0 + $0x1fc] sm:$0xf]
  %v141 = vld [vmem:[%s0 + $0x200] sm:$0xf]
  %v142 = vld [vmem:[%s0 + $0x204] sm:$0xf]
  %v143 = vld [vmem:[%s0 + $0x208] sm:$0xf]
  %v144 = vld [vmem:[%s0 + $0x20c] sm:$0xf]
  %v145 = vld [vmem:[%s0 + $0x210] sm:$0xf]
  %v146 = vld [vmem:[%s0 + $0x214] sm:$0xf]
  %v147 = vld [vmem:[%s0 + $0x218] sm:$0xf]
  %v148 = vld [vmem:[%s0 + $0x21c] sm:$0xf]
  %v149 = vld [vmem:[%s0 + $0x220] sm:$0xf]
  %v150 = vld [vmem:[%s0 + $0x224] sm:$0xf]
  %v151 = vld [vmem:[%s0 + $0x228] sm:$0xf]
  %v152 = vld [vmem:[%s0 + $0x22c] sm:$0xf]
  %v153 = vld [vmem:[%s0 + $0x230] sm:$0xf]
  %v154 = vld [vmem:[%s0 + $0x234] sm:$0xf]
  %v155 = vld [vmem:[%s0 + $0x238] sm:$0xf]
  %v156 = vld [vmem:[%s0 + $0x23c] sm:$0xf]
  %v157 = vld [vmem:[%s0 + $0x240] sm:$0xf]
  %v158 = vld [vmem:[%s0 + $0x244] sm:$0xf]
  %v159 = vld [vmem:[%s0 + $0x248] sm:$0xf]
  %v160 = vld [vmem:[%s0 + $0x24c] sm:$0xf]
  %v161 = vld [vmem:[%s0 + $0x250] sm:$0xf]
  %v162 = vld [vmem:[%s0 + $0x254] sm:$0xf]
  %v163 = vld [vmem:[%s0 + $0x258] sm:$0xf]
  %v164 = vld [vmem:[%s0 + $0x25c] sm:$0xf]
  %v165 = vld [vmem:[%s0 + $0x260] sm:$0xf]
  %v166 = vld [vmem:[%s0 + $0x264] sm:$0xf]
  %v167 = vld [vmem:[%s0 + $0x268] sm:$0xf]
  %v168 = vld [vmem:[%s0 + $0x26c] sm:$0xf]
  %v169 = vld [vmem:[%s0 + $0x270] sm:$0xf]
  %v170 = vld [vmem:[%s0 + $0x274] sm:$0xf]
  %v171 = vld [vmem:[%s0 + $0x278] sm:$0xf]
  %v172 = vld [vmem:[%s0 + $0x27c] sm:$0xf]
  %v173 = vld [vmem:[%s0 + $0x280] sm:$0xf]
  %v174 = vld [vmem:[%s0 + $0x284] sm:$0xf]
  %v175 = vld [vmem:[%s0 + $0x288] sm:$0xf]
  %v176 = vld [vmem:[%s0 + $0x28c] sm:$0xf]
  %v177 = vld [vmem:[%s0 + $0x290] sm:$0xf]
  %v178 = vld [vmem:[%s0 + $0x294] sm:$0xf]
  %v179 = vld [vmem:[%s0 + $0x298] sm:$0xf]
  %v180 = vld [vmem:[%s0 + $0x29c] sm:$0xf]
  %v181 = vld [vmem:[%s0 + $0x2a0] sm:$0xf]
  %v182 = vld [vmem:[%s0 + $0x2a4] sm:$0xf]
  %v183 = vld [vmem:[%s0 + $0x2a8] sm:$0xf]
  %v184 = vld [vmem:[%s0 + $0x2ac] sm:$0xf]
  %v185 = vld [vmem:[%s0 + $0x2b0] sm:$0xf]
  %v186 = vld [vmem:[%s0 + $0x2b4] sm:$0xf]
  %v187 = vld [vmem:[%s0 + $0x2b8] sm:$0xf]
  %v188 = vld [vmem:[%s0 + $0x2bc] sm:$0xf]
  %v189 = vld [vmem:[%s0 + $0x2c0] sm:$0xf]
  %v190 = vld [vmem:[%s0 + $0x2c4] sm:$0xf]
  %v191 = vld [vmem:[%s0 + $0x2c8] sm:$0xf]
  %v192 = vld [vmem:[%s0 + $0x2cc] sm:$0xf]
  %v193 = vld [vmem:[%s0 + $0x2d0] sm:$0xf]
  %v194 = vld [vmem:[%s0 + $0x2d4] sm:$0xf]
  %v195 = vld [vmem:[%s0 + $0x2d8] sm:$0xf]
  %v196 = vld [vmem:[%s0 + $0x2dc] sm:$0xf]
  %v197 = vld [vmem:[%s0 + $0x2e0] sm:$0xf]
  %v198 = vld [vmem:[%s0 + $0x2e4] sm:$0xf]
  %v199 = vld [vmem:[%s0 + $0x2e8] sm:$0xf]
  %v200 = vld [vmem:[%s0 + $0x2ec] sm:$0xf]
  %v201 = vld [vmem:[%s0 + $0x2f0] sm:$0xf]
  %v202 = vld [vmem:[%s0 + $0x2f4] sm:$0xf]
  %v203 = vld [vmem:[%s0 + $0x2f8] sm:$0xf]
  %v204 = vld [vmem:[%s0 + $0x2fc] sm:$0xf]
  %v205 = vld [vmem:[%s0 + $0x300] sm:$0xf]
  %v206 = vld [vmem:[%s0 + $0x304] sm:$0xf]
  %v207 = vld [vmem:[%s0 + $0x308] sm:$0xf]
  %v208 = vld [vmem:[%s0 + $0x30c] sm:$0xf]
  %v209 = vld [vmem:[%s0 + $0x310] sm:$0xf]
  %v210 = vld [vmem:[%s0 + $0x314] sm:$0xf]
  %v211 = vld [vmem:[%s0 + $0x318] sm:$0xf]
  %v212 = vld [vmem:[%s0 + $0x31c] sm:$0xf]
  %v213 = vld [vmem:[%s0 + $0x320] sm:$0xf]
  %v214 = vld [vmem:[%s0 + $0x324] sm:$0xf]
  %v215 = vld [vmem:[%s0 + $0x328] sm:$0xf]
  %v216 = vld [vmem:[%s0 + $0x32c] sm:$0xf]
  %v217 = vld [vmem:[%s0 + $0x330] sm:$0xf]
  %v218 = vld [vmem:[%s0 + $0x334] sm:$0xf]
  %v219 = vld [vmem:[%s0 + $0x338] sm:$0xf]
  %v220 = vld [vmem:[%s0 + $0x33c] sm:$0xf]
  %v221 = vunpack.c.l.bf16 %v13
  %v222 = vunpack.c.l.bf16 %v14
  %v223 = vunpack.c.l.bf16 %v15
  %v224 = vunpack.c.l.bf16 %v16
  %v225 = vunpack.c.l.bf16 %v17
  %v226 = vunpack.c.l.bf16 %v18
  %v227 = vunpack.c.l.bf16 %v19
  %v228 = vunpack.c.l.bf16 %v20
  %v229 = vunpack.c.l.bf16 %v21
  %v230 = vunpack.c.l.bf16 %v22
  %v231 = vunpack.c.l.bf16 %v23
  %v232 = vunpack.c.l.bf16 %v24
  %v233 = vunpack.c.l.bf16 %v25
  %v234 = vunpack.c.l.bf16 %v26
  %v235 = vunpack.c.l.bf16 %v27
  %v236 = vunpack.c.l.bf16 %v28
  %v237 = vunpack.c.l.bf16 %v29
  %v238 = vunpack.c.l.bf16 %v30
  %v239 = vunpack.c.l.bf16 %v31
  %v240 = vunpack.c.l.bf16 %v32
  %v241 = vunpack.c.l.bf16 %v33
  %v242 = vunpack.c.l.bf16 %v34
  %v243 = vunpack.c.l.bf16 %v35
  %v244 = vunpack.c.l.bf16 %v36
  %v245 = vunpack.c.l.bf16 %v37
  %v246 = vunpack.c.l.bf16 %v38
  %v247 = vunpack.c.l.bf16 %v39
  %v248 = vunpack.c.l.bf16 %v40
  %v249 = vunpack.c.l.bf16 %v41
  %v250 = vunpack.c.l.bf16 %v42
  %v251 = vunpack.c.l.bf16 %v43
  %v252 = vunpack.c.l.bf16 %v44
  %v253 = vunpack.c.l.bf16 %v45
  %v254 = vunpack.c.l.bf16 %v46
  %v255 = vunpack.c.l.bf16 %v47
  %v256 = vunpack.c.l.bf16 %v48
  %v257 = vunpack.c.l.bf16 %v49
  %v258 = vunpack.c.l.bf16 %v50
  %v259 = vunpack.c.l.bf16 %v51
  %v260 = vunpack.c.l.bf16 %v52
  %v261 = vunpack.c.l.bf16 %v53
  %v262 = vunpack.c.l.bf16 %v54
  %v263 = vunpack.c.l.bf16 %v55
  %v264 = vunpack.c.l.bf16 %v56
  %v265 = vunpack.c.l.bf16 %v57
  %v266 = vunpack.c.l.bf16 %v58
  %v267 = vunpack.c.l.bf16 %v59
  %v268 = vunpack.c.l.bf16 %v60
  %v269 = vunpack.c.l.bf16 %v61
  %v270 = vunpack.c.l.bf16 %v62
  %v271 = vunpack.c.l.bf16 %v63
  %v272 = vunpack.c.l.bf16 %v64
  %v273 = vunpack.c.l.bf16 %v65
  %v274 = vunpack.c.l.bf16 %v66
  %v275 = vunpack.c.l.bf16 %v67
  %v276 = vunpack.c.l.bf16 %v68
  %v277 = vunpack.c.l.bf16 %v69
  %v278 = vunpack.c.l.bf16 %v70
  %v279 = vunpack.c.l.bf16 %v71
  %v280 = vunpack.c.l.bf16 %v72
  %v281 = vunpack.c.l.bf16 %v73
  %v282 = vunpack.c.l.bf16 %v74
  %v283 = vunpack.c.l.bf16 %v75
  %v284 = vunpack.c.l.bf16 %v76
  %v285 = vunpack.c.l.bf16 %v77
  %v286 = vunpack.c.l.bf16 %v78
  %v287 = vunpack.c.l.bf16 %v79
  %v288 = vunpack.c.l.bf16 %v80
  %v289 = vunpack.c.l.bf16 %v81
  %v290 = vunpack.c.l.bf16 %v82
  %v291 = vunpack.c.l.bf16 %v83
  %v292 = vunpack.c.l.bf16 %v84
  %v293 = vunpack.c.l.bf16 %v85
  %v294 = vunpack.c.l.bf16 %v86
  %v295 = vunpack.c.l.bf16 %v87
  %v296 = vunpack.c.l.bf16 %v88
  %v297 = vunpack.c.l.bf16 %v89
  %v298 = vunpack.c.l.bf16 %v90
  %v299 = vunpack.c.l.bf16 %v91
  %v300 = vunpack.c.l.bf16 %v92
  %v301 = vunpack.c.l.bf16 %v93
  %v302 = vunpack.c.l.bf16 %v94
  %v303 = vunpack.c.l.bf16 %v95
  %v304 = vunpack.c.l.bf16 %v96
  %v305 = vunpack.c.l.bf16 %v97
  %v306 = vunpack.c.l.bf16 %v98
  %v307 = vunpack.c.l.bf16 %v99
  %v308 = vunpack.c.l.bf16 %v100
  %v309 = vunpack.c.l.bf16 %v101
  %v310 = vunpack.c.l.bf16 %v102
  %v311 = vunpack.c.l.bf16 %v103
  %v312 = vunpack.c.l.bf16 %v104
  %v313 = vunpack.c.l.bf16 %v105
  %v314 = vunpack.c.l.bf16 %v106
  %v315 = vunpack.c.l.bf16 %v107
  %v316 = vunpack.c.l.bf16 %v108
  %v317 = vunpack.c.l.bf16 %v109
  %v318 = vunpack.c.l.bf16 %v110
  %v319 = vunpack.c.l.bf16 %v111
  %v320 = vunpack.c.l.bf16 %v112
  %v321 = vunpack.c.l.bf16 %v113
  %v322 = vunpack.c.l.bf16 %v114
  %v323 = vunpack.c.l.bf16 %v115
  %v324 = vunpack.c.l.bf16 %v116
  %v325 = vunpack.c.l.bf16 %v117
  %v326 = vunpack.c.l.bf16 %v118
  %v327 = vunpack.c.l.bf16 %v119
  %v328 = vunpack.c.l.bf16 %v120
  %v329 = vunpack.c.l.bf16 %v121
  %v330 = vunpack.c.l.bf16 %v122
  %v331 = vunpack.c.l.bf16 %v123
  %v332 = vunpack.c.l.bf16 %v124
  %v333 = vunpack.c.l.bf16 %v125
  %v334 = vunpack.c.l.bf16 %v126
  %v335 = vunpack.c.l.bf16 %v127
  %v336 = vunpack.c.l.bf16 %v128
  %v337 = vunpack.c.l.bf16 %v129
  %v338 = vunpack.c.l.bf16 %v130
  %v339 = vunpack.c.l.bf16 %v131
  %v340 = vunpack.c.l.bf16 %v132
  %v341 = vunpack.c.l.bf16 %v133
  %v342 = vunpack.c.l.bf16 %v134
  %v343 = vunpack.c.l.bf16 %v135
  %v344 = vunpack.c.l.bf16 %v136
  %v345 = vunpack.c.l.bf16 %v137
  %v346 = vunpack.c.l.bf16 %v138
  %v347 = vunpack.c.l.bf16 %v139
  %v348 = vunpack.c.l.bf16 %v140
  %v349 = vunpack.c.l.bf16 %v141
  %v350 = vunpack.c.l.bf16 %v142
  %v351 = vunpack.c.l.bf16 %v143
  %v352 = vunpack.c.l.bf16 %v144
  %v353 = vunpack.c.l.bf16 %v145
  %v354 = vunpack.c.l.bf16 %v146
  %v355 = vunpack.c.l.bf16 %v147
  %v356 = vunpack.c.l.bf16 %v148
  %v357 = vunpack.c.l.bf16 %v149
  %v358 = vunpack.c.l.bf16 %v150
  %v359 = vunpack.c.l.bf16 %v151
  %v360 = vunpack.c.l.bf16 %v152
  %v361 = vunpack.c.l.bf16 %v153
  %v362 = vunpack.c.l.bf16 %v154
  %v363 = vunpack.c.l.bf16 %v155
  %v364 = vunpack.c.l.bf16 %v156
  %v365 = vunpack.c.l.bf16 %v157
  %v366 = vunpack.c.l.bf16 %v158
  %v367 = vunpack.c.l.bf16 %v159
  %v368 = vunpack.c.l.bf16 %v160
  %v369 = vunpack.c.l.bf16 %v161
  %v370 = vunpack.c.l.bf16 %v162
  %v371 = vunpack.c.l.bf16 %v163
  %v372 = vunpack.c.l.bf16 %v164
  %v373 = vunpack.c.l.bf16 %v165
  %v374 = vunpack.c.l.bf16 %v166
  %v375 = vunpack.c.l.bf16 %v167
  %v376 = vunpack.c.l.bf16 %v168
  %v377 = vunpack.c.l.bf16 %v169
  %v378 = vunpack.c.l.bf16 %v170
  %v379 = vunpack.c.l.bf16 %v171
  %v380 = vunpack.c.l.bf16 %v172
  %v381 = vunpack.c.l.bf16 %v173
  %v382 = vunpack.c.l.bf16 %v174
  %v383 = vunpack.c.l.bf16 %v175
  %v384 = vunpack.c.l.bf16 %v176
  %v385 = vunpack.c.l.bf16 %v177
  %v386 = vunpack.c.l.bf16 %v178
  %v387 = vunpack.c.l.bf16 %v179
  %v388 = vunpack.c.l.bf16 %v180
  %v389 = vunpack.c.l.bf16 %v181
  %v390 = vunpack.c.l.bf16 %v182
  %v391 = vunpack.c.l.bf16 %v183
  %v392 = vunpack.c.l.bf16 %v184
  %v393 = vunpack.c.l.bf16 %v185
  %v394 = vunpack.c.l.bf16 %v186
  %v395 = vunpack.c.l.bf16 %v187
  %v396 = vunpack.c.l.bf16 %v188
  %v397 = vunpack.c.l.bf16 %v189
  %v398 = vunpack.c.l.bf16 %v190
  %v399 = vunpack.c.l.bf16 %v191
  %v400 = vunpack.c.l.bf16 %v192
  %v401 = vunpack.c.l.bf16 %v193
  %v402 = vunpack.c.l.bf16 %v194
  %v403 = vunpack.c.l.bf16 %v195
  %v404 = vunpack.c.l.bf16 %v196
  %v405 = vunpack.c.l.bf16 %v197
  %v406 = vunpack.c.l.bf16 %v198
  %v407 = vunpack.c.l.bf16 %v199
  %v408 = vunpack.c.l.bf16 %v200
  %v409 = vunpack.c.l.bf16 %v201
  %v410 = vunpack.c.l.bf16 %v202
  %v411 = vunpack.c.l.bf16 %v203
  %v412 = vunpack.c.l.bf16 %v204
  %v413 = vunpack.c.l.bf16 %v205
  %v414 = vunpack.c.l.bf16 %v206
  %v415 = vunpack.c.l.bf16 %v207
  %v416 = vunpack.c.l.bf16 %v208
  %v417 = vunpack.c.l.bf16 %v209
  %v418 = vunpack.c.l.bf16 %v210
  %v419 = vunpack.c.l.bf16 %v211
  %v420 = vunpack.c.l.bf16 %v212
  %v421 = vunpack.c.l.bf16 %v213
  %v422 = vunpack.c.l.bf16 %v214
  %v423 = vunpack.c.l.bf16 %v215
  %v424 = vunpack.c.l.bf16 %v216
  %v425 = vunpack.c.l.bf16 %v217
  %v426 = vunpack.c.l.bf16 %v218
  %v427 = vunpack.c.l.bf16 %v219
  %v428 = vunpack.c.l.bf16 %v220
  %v429 = vld [vmem:[%s1] sm:$0x1]
  %vm430 = vcmask 261120
  %v431 = vsel %vm430, %v221, 0.0
  %432 = vadd.xlane.f32.xlu0 %v431
  %v433 = vpop.xlane.xlu0 %432
  %v434 = vsel %vm430, %v222, 0.0
  %435 = vadd.xlane.f32.xlu0 %v434
  %v436 = vpop.xlane.xlu0 %435
  %v437 = vsel %vm430, %v223, 0.0
  %438 = vadd.xlane.f32.xlu0 %v437
  %v439 = vpop.xlane.xlu0 %438
  %v440 = vsel %vm430, %v224, 0.0
  %441 = vadd.xlane.f32.xlu0 %v440
  %v442 = vpop.xlane.xlu0 %441
  %v443 = vsel %vm430, %v225, 0.0
  %444 = vadd.xlane.f32.xlu0 %v443
  %v445 = vpop.xlane.xlu0 %444
  %v446 = vsel %vm430, %v226, 0.0
  %447 = vadd.xlane.f32.xlu0 %v446
  %v448 = vpop.xlane.xlu0 %447
  %v449 = vsel %vm430, %v227, 0.0
  %450 = vadd.xlane.f32.xlu0 %v449
  %v451 = vpop.xlane.xlu0 %450
  %v452 = vsel %vm430, %v228, 0.0
  %453 = vadd.xlane.f32.xlu0 %v452
  %v454 = vpop.xlane.xlu0 %453
  %v455 = vsel %vm430, %v229, 0.0
  %456 = vadd.xlane.f32.xlu0 %v455
  %v457 = vpop.xlane.xlu0 %456
  %v458 = vsel %vm430, %v230, 0.0
  %459 = vadd.xlane.f32.xlu0 %v458
  %v460 = vpop.xlane.xlu0 %459
  %v461 = vsel %vm430, %v231, 0.0
  %462 = vadd.xlane.f32.xlu0 %v461
  %v463 = vpop.xlane.xlu0 %462
  %v464 = vsel %vm430, %v232, 0.0
  %465 = vadd.xlane.f32.xlu0 %v464
  %v466 = vpop.xlane.xlu0 %465
  %v467 = vsel %vm430, %v233, 0.0
  %468 = vadd.xlane.f32.xlu0 %v467
  %v469 = vpop.xlane.xlu0 %468
  %v470 = vsel %vm430, %v234, 0.0
  %471 = vadd.xlane.f32.xlu0 %v470
  %v472 = vpop.xlane.xlu0 %471
  %v473 = vsel %vm430, %v235, 0.0
  %474 = vadd.xlane.f32.xlu0 %v473
  %v475 = vpop.xlane.xlu0 %474
  %v476 = vsel %vm430, %v236, 0.0
  %477 = vadd.xlane.f32.xlu0 %v476
  %v478 = vpop.xlane.xlu0 %477
  %v479 = vsel %vm430, %v237, 0.0
  %480 = vadd.xlane.f32.xlu0 %v479
  %v481 = vpop.xlane.xlu0 %480
  %v482 = vsel %vm430, %v238, 0.0
  %483 = vadd.xlane.f32.xlu0 %v482
  %v484 = vpop.xlane.xlu0 %483
  %v485 = vsel %vm430, %v239, 0.0
  %486 = vadd.xlane.f32.xlu0 %v485
  %v487 = vpop.xlane.xlu0 %486
  %v488 = vsel %vm430, %v240, 0.0
  %489 = vadd.xlane.f32.xlu0 %v488
  %v490 = vpop.xlane.xlu0 %489
  %v491 = vsel %vm430, %v241, 0.0
  %492 = vadd.xlane.f32.xlu0 %v491
  %v493 = vpop.xlane.xlu0 %492
  %v494 = vsel %vm430, %v242, 0.0
  %495 = vadd.xlane.f32.xlu0 %v494
  %v496 = vpop.xlane.xlu0 %495
  %v497 = vsel %vm430, %v243, 0.0
  %498 = vadd.xlane.f32.xlu0 %v497
  %v499 = vpop.xlane.xlu0 %498
  %v500 = vsel %vm430, %v244, 0.0
  %501 = vadd.xlane.f32.xlu0 %v500
  %v502 = vpop.xlane.xlu0 %501
  %v503 = vsel %vm430, %v245, 0.0
  %504 = vadd.xlane.f32.xlu0 %v503
  %v505 = vpop.xlane.xlu0 %504
  %v506 = vsel %vm430, %v246, 0.0
  %507 = vadd.xlane.f32.xlu0 %v506
  %v508 = vpop.xlane.xlu0 %507
  %v509 = vsel %vm430, %v247, 0.0
  %510 = vadd.xlane.f32.xlu0 %v509
  %v511 = vpop.xlane.xlu0 %510
  %v512 = vsel %vm430, %v248, 0.0
  %513 = vadd.xlane.f32.xlu0 %v512
  %v514 = vpop.xlane.xlu0 %513
  %v515 = vsel %vm430, %v249, 0.0
  %516 = vadd.xlane.f32.xlu0 %v515
  %v517 = vpop.xlane.xlu0 %516
  %v518 = vsel %vm430, %v250, 0.0
  %519 = vadd.xlane.f32.xlu0 %v518
  %v520 = vpop.xlane.xlu0 %519
  %v521 = vsel %vm430, %v251, 0.0
  %522 = vadd.xlane.f32.xlu0 %v521
  %v523 = vpop.xlane.xlu0 %522
  %v524 = vsel %vm430, %v252, 0.0
  %525 = vadd.xlane.f32.xlu0 %v524
  %v526 = vpop.xlane.xlu0 %525
  %v527 = vsel %vm430, %v253, 0.0
  %528 = vadd.xlane.f32.xlu0 %v527
  %v529 = vpop.xlane.xlu0 %528
  %v530 = vsel %vm430, %v254, 0.0
  %531 = vadd.xlane.f32.xlu0 %v530
  %v532 = vpop.xlane.xlu0 %531
  %v533 = vsel %vm430, %v255, 0.0
  %534 = vadd.xlane.f32.xlu0 %v533
  %v535 = vpop.xlane.xlu0 %534
  %v536 = vsel %vm430, %v256, 0.0
  %537 = vadd.xlane.f32.xlu0 %v536
  %v538 = vpop.xlane.xlu0 %537
  %v539 = vsel %vm430, %v257, 0.0
  %540 = vadd.xlane.f32.xlu0 %v539
  %v541 = vpop.xlane.xlu0 %540
  %v542 = vsel %vm430, %v258, 0.0
  %543 = vadd.xlane.f32.xlu0 %v542
  %v544 = vpop.xlane.xlu0 %543
  %v545 = vsel %vm430, %v259, 0.0
  %546 = vadd.xlane.f32.xlu0 %v545
  %v547 = vpop.xlane.xlu0 %546
  %v548 = vsel %vm430, %v260, 0.0
  %549 = vadd.xlane.f32.xlu0 %v548
  %v550 = vpop.xlane.xlu0 %549
  %v551 = vsel %vm430, %v261, 0.0
  %552 = vadd.xlane.f32.xlu0 %v551
  %v553 = vpop.xlane.xlu0 %552
  %v554 = vsel %vm430, %v262, 0.0
  %555 = vadd.xlane.f32.xlu0 %v554
  %v556 = vpop.xlane.xlu0 %555
  %v557 = vsel %vm430, %v263, 0.0
  %558 = vadd.xlane.f32.xlu0 %v557
  %v559 = vpop.xlane.xlu0 %558
  %v560 = vsel %vm430, %v264, 0.0
  %561 = vadd.xlane.f32.xlu0 %v560
  %v562 = vpop.xlane.xlu0 %561
  %v563 = vsel %vm430, %v265, 0.0
  %564 = vadd.xlane.f32.xlu0 %v563
  %v565 = vpop.xlane.xlu0 %564
  %v566 = vsel %vm430, %v266, 0.0
  %567 = vadd.xlane.f32.xlu0 %v566
  %v568 = vpop.xlane.xlu0 %567
  %v569 = vsel %vm430, %v267, 0.0
  %570 = vadd.xlane.f32.xlu0 %v569
  %v571 = vpop.xlane.xlu0 %570
  %v572 = vsel %vm430, %v268, 0.0
  %573 = vadd.xlane.f32.xlu0 %v572
  %v574 = vpop.xlane.xlu0 %573
  %v575 = vsel %vm430, %v269, 0.0
  %576 = vadd.xlane.f32.xlu0 %v575
  %v577 = vpop.xlane.xlu0 %576
  %v578 = vsel %vm430, %v270, 0.0
  %579 = vadd.xlane.f32.xlu0 %v578
  %v580 = vpop.xlane.xlu0 %579
  %v581 = vsel %vm430, %v271, 0.0
  %582 = vadd.xlane.f32.xlu0 %v581
  %v583 = vpop.xlane.xlu0 %582
  %v584 = vsel %vm430, %v272, 0.0
  %585 = vadd.xlane.f32.xlu0 %v584
  %v586 = vpop.xlane.xlu0 %585
  %v587 = vsel %vm430, %v273, 0.0
  %588 = vadd.xlane.f32.xlu0 %v587
  %v589 = vpop.xlane.xlu0 %588
  %v590 = vsel %vm430, %v274, 0.0
  %591 = vadd.xlane.f32.xlu0 %v590
  %v592 = vpop.xlane.xlu0 %591
  %v593 = vsel %vm430, %v275, 0.0
  %594 = vadd.xlane.f32.xlu0 %v593
  %v595 = vpop.xlane.xlu0 %594
  %v596 = vsel %vm430, %v276, 0.0
  %597 = vadd.xlane.f32.xlu0 %v596
  %v598 = vpop.xlane.xlu0 %597
  %v599 = vsel %vm430, %v277, 0.0
  %600 = vadd.xlane.f32.xlu0 %v599
  %v601 = vpop.xlane.xlu0 %600
  %v602 = vsel %vm430, %v278, 0.0
  %603 = vadd.xlane.f32.xlu0 %v602
  %v604 = vpop.xlane.xlu0 %603
  %v605 = vsel %vm430, %v279, 0.0
  %606 = vadd.xlane.f32.xlu0 %v605
  %v607 = vpop.xlane.xlu0 %606
  %v608 = vsel %vm430, %v280, 0.0
  %609 = vadd.xlane.f32.xlu0 %v608
  %v610 = vpop.xlane.xlu0 %609
  %v611 = vsel %vm430, %v281, 0.0
  %612 = vadd.xlane.f32.xlu0 %v611
  %v613 = vpop.xlane.xlu0 %612
  %v614 = vsel %vm430, %v282, 0.0
  %615 = vadd.xlane.f32.xlu0 %v614
  %v616 = vpop.xlane.xlu0 %615
  %v617 = vsel %vm430, %v283, 0.0
  %618 = vadd.xlane.f32.xlu0 %v617
  %v619 = vpop.xlane.xlu0 %618
  %v620 = vsel %vm430, %v284, 0.0
  %621 = vadd.xlane.f32.xlu0 %v620
  %v622 = vpop.xlane.xlu0 %621
  %v623 = vsel %vm430, %v285, 0.0
  %624 = vadd.xlane.f32.xlu0 %v623
  %v625 = vpop.xlane.xlu0 %624
  %v626 = vsel %vm430, %v286, 0.0
  %627 = vadd.xlane.f32.xlu0 %v626
  %v628 = vpop.xlane.xlu0 %627
  %v629 = vsel %vm430, %v287, 0.0
  %630 = vadd.xlane.f32.xlu0 %v629
  %v631 = vpop.xlane.xlu0 %630
  %v632 = vsel %vm430, %v288, 0.0
  %633 = vadd.xlane.f32.xlu0 %v632
  %v634 = vpop.xlane.xlu0 %633
  %v635 = vsel %vm430, %v289, 0.0
  %636 = vadd.xlane.f32.xlu0 %v635
  %v637 = vpop.xlane.xlu0 %636
  %v638 = vsel %vm430, %v290, 0.0
  %639 = vadd.xlane.f32.xlu0 %v638
  %v640 = vpop.xlane.xlu0 %639
  %v641 = vsel %vm430, %v291, 0.0
  %642 = vadd.xlane.f32.xlu0 %v641
  %v643 = vpop.xlane.xlu0 %642
  %v644 = vsel %vm430, %v292, 0.0
  %645 = vadd.xlane.f32.xlu0 %v644
  %v646 = vpop.xlane.xlu0 %645
  %v647 = vsel %vm430, %v293, 0.0
  %648 = vadd.xlane.f32.xlu0 %v647
  %v649 = vpop.xlane.xlu0 %648
  %v650 = vsel %vm430, %v294, 0.0
  %651 = vadd.xlane.f32.xlu0 %v650
  %v652 = vpop.xlane.xlu0 %651
  %v653 = vsel %vm430, %v295, 0.0
  %654 = vadd.xlane.f32.xlu0 %v653
  %v655 = vpop.xlane.xlu0 %654
  %v656 = vsel %vm430, %v296, 0.0
  %657 = vadd.xlane.f32.xlu0 %v656
  %v658 = vpop.xlane.xlu0 %657
  %v659 = vsel %vm430, %v297, 0.0
  %660 = vadd.xlane.f32.xlu0 %v659
  %v661 = vpop.xlane.xlu0 %660
  %v662 = vsel %vm430, %v298, 0.0
  %663 = vadd.xlane.f32.xlu0 %v662
  %v664 = vpop.xlane.xlu0 %663
  %v665 = vsel %vm430, %v299, 0.0
  %666 = vadd.xlane.f32.xlu0 %v665
  %v667 = vpop.xlane.xlu0 %666
  %v668 = vsel %vm430, %v300, 0.0
  %669 = vadd.xlane.f32.xlu0 %v668
  %v670 = vpop.xlane.xlu0 %669
  %v671 = vsel %vm430, %v301, 0.0
  %672 = vadd.xlane.f32.xlu0 %v671
  %v673 = vpop.xlane.xlu0 %672
  %v674 = vsel %vm430, %v302, 0.0
  %675 = vadd.xlane.f32.xlu0 %v674
  %v676 = vpop.xlane.xlu0 %675
  %v677 = vsel %vm430, %v303, 0.0
  %678 = vadd.xlane.f32.xlu0 %v677
  %v679 = vpop.xlane.xlu0 %678
  %v680 = vsel %vm430, %v304, 0.0
  %681 = vadd.xlane.f32.xlu0 %v680
  %v682 = vpop.xlane.xlu0 %681
  %v683 = vsel %vm430, %v305, 0.0
  %684 = vadd.xlane.f32.xlu0 %v683
  %v685 = vpop.xlane.xlu0 %684
  %v686 = vsel %vm430, %v306, 0.0
  %687 = vadd.xlane.f32.xlu0 %v686
  %v688 = vpop.xlane.xlu0 %687
  %v689 = vsel %vm430, %v307, 0.0
  %690 = vadd.xlane.f32.xlu0 %v689
  %v691 = vpop.xlane.xlu0 %690
  %v692 = vsel %vm430, %v308, 0.0
  %693 = vadd.xlane.f32.xlu0 %v692
  %v694 = vpop.xlane.xlu0 %693
  %v695 = vsel %vm430, %v309, 0.0
  %696 = vadd.xlane.f32.xlu0 %v695
  %v697 = vpop.xlane.xlu0 %696
  %v698 = vsel %vm430, %v310, 0.0
  %699 = vadd.xlane.f32.xlu0 %v698
  %v700 = vpop.xlane.xlu0 %699
  %v701 = vsel %vm430, %v311, 0.0
  %702 = vadd.xlane.f32.xlu0 %v701
  %v703 = vpop.xlane.xlu0 %702
  %v704 = vsel %vm430, %v312, 0.0
  %705 = vadd.xlane.f32.xlu0 %v704
  %v706 = vpop.xlane.xlu0 %705
  %v707 = vsel %vm430, %v313, 0.0
  %708 = vadd.xlane.f32.xlu0 %v707
  %v709 = vpop.xlane.xlu0 %708
  %v710 = vsel %vm430, %v314, 0.0
  %711 = vadd.xlane.f32.xlu0 %v710
  %v712 = vpop.xlane.xlu0 %711
  %v713 = vsel %vm430, %v315, 0.0
  %714 = vadd.xlane.f32.xlu0 %v713
  %v715 = vpop.xlane.xlu0 %714
  %v716 = vsel %vm430, %v316, 0.0
  %717 = vadd.xlane.f32.xlu0 %v716
  %v718 = vpop.xlane.xlu0 %717
  %v719 = vsel %vm430, %v317, 0.0
  %720 = vadd.xlane.f32.xlu0 %v719
  %v721 = vpop.xlane.xlu0 %720
  %v722 = vsel %vm430, %v318, 0.0
  %723 = vadd.xlane.f32.xlu0 %v722
  %v724 = vpop.xlane.xlu0 %723
  %v725 = vsel %vm430, %v319, 0.0
  %726 = vadd.xlane.f32.xlu0 %v725
  %v727 = vpop.xlane.xlu0 %726
  %v728 = vsel %vm430, %v320, 0.0
  %729 = vadd.xlane.f32.xlu0 %v728
  %v730 = vpop.xlane.xlu0 %729
  %v731 = vsel %vm430, %v321, 0.0
  %732 = vadd.xlane.f32.xlu0 %v731
  %v733 = vpop.xlane.xlu0 %732
  %v734 = vsel %vm430, %v322, 0.0
  %735 = vadd.xlane.f32.xlu0 %v734
  %v736 = vpop.xlane.xlu0 %735
  %v737 = vsel %vm430, %v323, 0.0
  %738 = vadd.xlane.f32.xlu0 %v737
  %v739 = vpop.xlane.xlu0 %738
  %v740 = vsel %vm430, %v324, 0.0
  %741 = vadd.xlane.f32.xlu0 %v740
  %v742 = vpop.xlane.xlu0 %741
  %v743 = vsel %vm430, %v325, 0.0
  %744 = vadd.xlane.f32.xlu0 %v743
  %v745 = vpop.xlane.xlu0 %744
  %v746 = vsel %vm430, %v326, 0.0
  %747 = vadd.xlane.f32.xlu0 %v746
  %v748 = vpop.xlane.xlu0 %747
  %v749 = vsel %vm430, %v327, 0.0
  %750 = vadd.xlane.f32.xlu0 %v749
  %v751 = vpop.xlane.xlu0 %750
  %v752 = vsel %vm430, %v328, 0.0
  %753 = vadd.xlane.f32.xlu0 %v752
  %v754 = vpop.xlane.xlu0 %753
  %v755 = vsel %vm430, %v329, 0.0
  %756 = vadd.xlane.f32.xlu0 %v755
  %v757 = vpop.xlane.xlu0 %756
  %v758 = vsel %vm430, %v330, 0.0
  %759 = vadd.xlane.f32.xlu0 %v758
  %v760 = vpop.xlane.xlu0 %759
  %v761 = vsel %vm430, %v331, 0.0
  %762 = vadd.xlane.f32.xlu0 %v761
  %v763 = vpop.xlane.xlu0 %762
  %v764 = vsel %vm430, %v332, 0.0
  %765 = vadd.xlane.f32.xlu0 %v764
  %v766 = vpop.xlane.xlu0 %765
  %v767 = vsel %vm430, %v333, 0.0
  %768 = vadd.xlane.f32.xlu0 %v767
  %v769 = vpop.xlane.xlu0 %768
  %v770 = vsel %vm430, %v334, 0.0
  %771 = vadd.xlane.f32.xlu0 %v770
  %v772 = vpop.xlane.xlu0 %771
  %v773 = vsel %vm430, %v335, 0.0
  %774 = vadd.xlane.f32.xlu0 %v773
  %v775 = vpop.xlane.xlu0 %774
  %v776 = vsel %vm430, %v336, 0.0
  %777 = vadd.xlane.f32.xlu0 %v776
  %v778 = vpop.xlane.xlu0 %777
  %v779 = vsel %vm430, %v337, 0.0
  %780 = vadd.xlane.f32.xlu0 %v779
  %v781 = vpop.xlane.xlu0 %780
  %v782 = vsel %vm430, %v338, 0.0
  %783 = vadd.xlane.f32.xlu0 %v782
  %v784 = vpop.xlane.xlu0 %783
  %v785 = vsel %vm430, %v339, 0.0
  %786 = vadd.xlane.f32.xlu0 %v785
  %v787 = vpop.xlane.xlu0 %786
  %v788 = vsel %vm430, %v340, 0.0
  %789 = vadd.xlane.f32.xlu0 %v788
  %v790 = vpop.xlane.xlu0 %789
  %v791 = vsel %vm430, %v341, 0.0
  %792 = vadd.xlane.f32.xlu0 %v791
  %v793 = vpop.xlane.xlu0 %792
  %v794 = vsel %vm430, %v342, 0.0
  %795 = vadd.xlane.f32.xlu0 %v794
  %v796 = vpop.xlane.xlu0 %795
  %v797 = vsel %vm430, %v343, 0.0
  %798 = vadd.xlane.f32.xlu0 %v797
  %v799 = vpop.xlane.xlu0 %798
  %v800 = vsel %vm430, %v344, 0.0
  %801 = vadd.xlane.f32.xlu0 %v800
  %v802 = vpop.xlane.xlu0 %801
  %v803 = vsel %vm430, %v345, 0.0
  %804 = vadd.xlane.f32.xlu0 %v803
  %v805 = vpop.xlane.xlu0 %804
  %v806 = vsel %vm430, %v346, 0.0
  %807 = vadd.xlane.f32.xlu0 %v806
  %v808 = vpop.xlane.xlu0 %807
  %v809 = vsel %vm430, %v347, 0.0
  %810 = vadd.xlane.f32.xlu0 %v809
  %v811 = vpop.xlane.xlu0 %810
  %v812 = vsel %vm430, %v348, 0.0
  %813 = vadd.xlane.f32.xlu0 %v812
  %v814 = vpop.xlane.xlu0 %813
  %v815 = vsel %vm430, %v349, 0.0
  %816 = vadd.xlane.f32.xlu0 %v815
  %v817 = vpop.xlane.xlu0 %816
  %v818 = vsel %vm430, %v350, 0.0
  %819 = vadd.xlane.f32.xlu0 %v818
  %v820 = vpop.xlane.xlu0 %819
  %v821 = vsel %vm430, %v351, 0.0
  %822 = vadd.xlane.f32.xlu0 %v821
  %v823 = vpop.xlane.xlu0 %822
  %v824 = vsel %vm430, %v352, 0.0
  %825 = vadd.xlane.f32.xlu0 %v824
  %v826 = vpop.xlane.xlu0 %825
  %v827 = vsel %vm430, %v353, 0.0
  %828 = vadd.xlane.f32.xlu0 %v827
  %v829 = vpop.xlane.xlu0 %828
  %v830 = vsel %vm430, %v354, 0.0
  %831 = vadd.xlane.f32.xlu0 %v830
  %v832 = vpop.xlane.xlu0 %831
  %v833 = vsel %vm430, %v355, 0.0
  %834 = vadd.xlane.f32.xlu0 %v833
  %v835 = vpop.xlane.xlu0 %834
  %v836 = vsel %vm430, %v356, 0.0
  %837 = vadd.xlane.f32.xlu0 %v836
  %v838 = vpop.xlane.xlu0 %837
  %v839 = vsel %vm430, %v357, 0.0
  %840 = vadd.xlane.f32.xlu0 %v839
  %v841 = vpop.xlane.xlu0 %840
  %v842 = vsel %vm430, %v358, 0.0
  %843 = vadd.xlane.f32.xlu0 %v842
  %v844 = vpop.xlane.xlu0 %843
  %v845 = vsel %vm430, %v359, 0.0
  %846 = vadd.xlane.f32.xlu0 %v845
  %v847 = vpop.xlane.xlu0 %846
  %v848 = vsel %vm430, %v360, 0.0
  %849 = vadd.xlane.f32.xlu0 %v848
  %v850 = vpop.xlane.xlu0 %849
  %v851 = vsel %vm430, %v361, 0.0
  %852 = vadd.xlane.f32.xlu0 %v851
  %v853 = vpop.xlane.xlu0 %852
  %v854 = vsel %vm430, %v362, 0.0
  %855 = vadd.xlane.f32.xlu0 %v854
  %v856 = vpop.xlane.xlu0 %855
  %v857 = vsel %vm430, %v363, 0.0
  %858 = vadd.xlane.f32.xlu0 %v857
  %v859 = vpop.xlane.xlu0 %858
  %v860 = vsel %vm430, %v364, 0.0
  %861 = vadd.xlane.f32.xlu0 %v860
  %v862 = vpop.xlane.xlu0 %861
  %v863 = vsel %vm430, %v365, 0.0
  %864 = vadd.xlane.f32.xlu0 %v863
  %v865 = vpop.xlane.xlu0 %864
  %v866 = vsel %vm430, %v366, 0.0
  %867 = vadd.xlane.f32.xlu0 %v866
  %v868 = vpop.xlane.xlu0 %867
  %v869 = vsel %vm430, %v367, 0.0
  %870 = vadd.xlane.f32.xlu0 %v869
  %v871 = vpop.xlane.xlu0 %870
  %v872 = vsel %vm430, %v368, 0.0
  %873 = vadd.xlane.f32.xlu0 %v872
  %v874 = vpop.xlane.xlu0 %873
  %v875 = vsel %vm430, %v369, 0.0
  %876 = vadd.xlane.f32.xlu0 %v875
  %v877 = vpop.xlane.xlu0 %876
  %v878 = vsel %vm430, %v370, 0.0
  %879 = vadd.xlane.f32.xlu0 %v878
  %v880 = vpop.xlane.xlu0 %879
  %v881 = vsel %vm430, %v371, 0.0
  %882 = vadd.xlane.f32.xlu0 %v881
  %v883 = vpop.xlane.xlu0 %882
  %v884 = vsel %vm430, %v372, 0.0
  %885 = vadd.xlane.f32.xlu0 %v884
  %v886 = vpop.xlane.xlu0 %885
  %v887 = vsel %vm430, %v373, 0.0
  %888 = vadd.xlane.f32.xlu0 %v887
  %v889 = vpop.xlane.xlu0 %888
  %v890 = vsel %vm430, %v374, 0.0
  %891 = vadd.xlane.f32.xlu0 %v890
  %v892 = vpop.xlane.xlu0 %891
  %v893 = vsel %vm430, %v375, 0.0
  %894 = vadd.xlane.f32.xlu0 %v893
  %v895 = vpop.xlane.xlu0 %894
  %v896 = vsel %vm430, %v376, 0.0
  %897 = vadd.xlane.f32.xlu0 %v896
  %v898 = vpop.xlane.xlu0 %897
  %v899 = vsel %vm430, %v377, 0.0
  %900 = vadd.xlane.f32.xlu0 %v899
  %v901 = vpop.xlane.xlu0 %900
  %v902 = vsel %vm430, %v378, 0.0
  %903 = vadd.xlane.f32.xlu0 %v902
  %v904 = vpop.xlane.xlu0 %903
  %v905 = vsel %vm430, %v379, 0.0
  %906 = vadd.xlane.f32.xlu0 %v905
  %v907 = vpop.xlane.xlu0 %906
  %v908 = vsel %vm430, %v380, 0.0
  %909 = vadd.xlane.f32.xlu0 %v908
  %v910 = vpop.xlane.xlu0 %909
  %v911 = vsel %vm430, %v381, 0.0
  %912 = vadd.xlane.f32.xlu0 %v911
  %v913 = vpop.xlane.xlu0 %912
  %v914 = vsel %vm430, %v382, 0.0
  %915 = vadd.xlane.f32.xlu0 %v914
  %v916 = vpop.xlane.xlu0 %915
  %v917 = vsel %vm430, %v383, 0.0
  %918 = vadd.xlane.f32.xlu0 %v917
  %v919 = vpop.xlane.xlu0 %918
  %v920 = vsel %vm430, %v384, 0.0
  %921 = vadd.xlane.f32.xlu0 %v920
  %v922 = vpop.xlane.xlu0 %921
  %v923 = vsel %vm430, %v385, 0.0
  %924 = vadd.xlane.f32.xlu0 %v923
  %v925 = vpop.xlane.xlu0 %924
  %v926 = vsel %vm430, %v386, 0.0
  %927 = vadd.xlane.f32.xlu0 %v926
  %v928 = vpop.xlane.xlu0 %927
  %v929 = vsel %vm430, %v387, 0.0
  %930 = vadd.xlane.f32.xlu0 %v929
  %v931 = vpop.xlane.xlu0 %930
  %v932 = vsel %vm430, %v388, 0.0
  %933 = vadd.xlane.f32.xlu0 %v932
  %v934 = vpop.xlane.xlu0 %933
  %v935 = vsel %vm430, %v389, 0.0
  %936 = vadd.xlane.f32.xlu0 %v935
  %v937 = vpop.xlane.xlu0 %936
  %v938 = vsel %vm430, %v390, 0.0
  %939 = vadd.xlane.f32.xlu0 %v938
  %v940 = vpop.xlane.xlu0 %939
  %v941 = vsel %vm430, %v391, 0.0
  %942 = vadd.xlane.f32.xlu0 %v941
  %v943 = vpop.xlane.xlu0 %942
  %v944 = vsel %vm430, %v392, 0.0
  %945 = vadd.xlane.f32.xlu0 %v944
  %v946 = vpop.xlane.xlu0 %945
  %v947 = vsel %vm430, %v393, 0.0
  %948 = vadd.xlane.f32.xlu0 %v947
  %v949 = vpop.xlane.xlu0 %948
  %v950 = vsel %vm430, %v394, 0.0
  %951 = vadd.xlane.f32.xlu0 %v950
  %v952 = vpop.xlane.xlu0 %951
  %v953 = vsel %vm430, %v395, 0.0
  %954 = vadd.xlane.f32.xlu0 %v953
  %v955 = vpop.xlane.xlu0 %954
  %v956 = vsel %vm430, %v396, 0.0
  %957 = vadd.xlane.f32.xlu0 %v956
  %v958 = vpop.xlane.xlu0 %957
  %v959 = vsel %vm430, %v397, 0.0
  %960 = vadd.xlane.f32.xlu0 %v959
  %v961 = vpop.xlane.xlu0 %960
  %v962 = vsel %vm430, %v398, 0.0
  %963 = vadd.xlane.f32.xlu0 %v962
  %v964 = vpop.xlane.xlu0 %963
  %v965 = vsel %vm430, %v399, 0.0
  %966 = vadd.xlane.f32.xlu0 %v965
  %v967 = vpop.xlane.xlu0 %966
  %v968 = vsel %vm430, %v400, 0.0
  %969 = vadd.xlane.f32.xlu0 %v968
  %v970 = vpop.xlane.xlu0 %969
  %v971 = vsel %vm430, %v401, 0.0
  %972 = vadd.xlane.f32.xlu0 %v971
  %v973 = vpop.xlane.xlu0 %972
  %v974 = vsel %vm430, %v402, 0.0
  %975 = vadd.xlane.f32.xlu0 %v974
  %v976 = vpop.xlane.xlu0 %975
  %v977 = vsel %vm430, %v403, 0.0
  %978 = vadd.xlane.f32.xlu0 %v977
  %v979 = vpop.xlane.xlu0 %978
  %v980 = vsel %vm430, %v404, 0.0
  %981 = vadd.xlane.f32.xlu0 %v980
  %v982 = vpop.xlane.xlu0 %981
  %v983 = vsel %vm430, %v405, 0.0
  %984 = vadd.xlane.f32.xlu0 %v983
  %v985 = vpop.xlane.xlu0 %984
  %v986 = vsel %vm430, %v406, 0.0
  %987 = vadd.xlane.f32.xlu0 %v986
  %v988 = vpop.xlane.xlu0 %987
  %v989 = vsel %vm430, %v407, 0.0
  %990 = vadd.xlane.f32.xlu0 %v989
  %v991 = vpop.xlane.xlu0 %990
  %v992 = vsel %vm430, %v408, 0.0
  %993 = vadd.xlane.f32.xlu0 %v992
  %v994 = vpop.xlane.xlu0 %993
  %v995 = vsel %vm430, %v409, 0.0
  %996 = vadd.xlane.f32.xlu0 %v995
  %v997 = vpop.xlane.xlu0 %996
  %v998 = vsel %vm430, %v410, 0.0
  %999 = vadd.xlane.f32.xlu0 %v998
  %v1000 = vpop.xlane.xlu0 %999
  %v1001 = vsel %vm430, %v411, 0.0
  %1002 = vadd.xlane.f32.xlu0 %v1001
  %v1003 = vpop.xlane.xlu0 %1002
  %v1004 = vsel %vm430, %v412, 0.0
  %1005 = vadd.xlane.f32.xlu0 %v1004
  %v1006 = vpop.xlane.xlu0 %1005
  %v1007 = vsel %vm430, %v413, 0.0
  %1008 = vadd.xlane.f32.xlu0 %v1007
  %v1009 = vpop.xlane.xlu0 %1008
  %v1010 = vsel %vm430, %v414, 0.0
  %1011 = vadd.xlane.f32.xlu0 %v1010
  %v1012 = vpop.xlane.xlu0 %1011
  %v1013 = vsel %vm430, %v415, 0.0
  %1014 = vadd.xlane.f32.xlu0 %v1013
  %v1015 = vpop.xlane.xlu0 %1014
  %v1016 = vsel %vm430, %v416, 0.0
  %1017 = vadd.xlane.f32.xlu0 %v1016
  %v1018 = vpop.xlane.xlu0 %1017
  %v1019 = vsel %vm430, %v417, 0.0
  %1020 = vadd.xlane.f32.xlu0 %v1019
  %v1021 = vpop.xlane.xlu0 %1020
  %v1022 = vsel %vm430, %v418, 0.0
  %1023 = vadd.xlane.f32.xlu0 %v1022
  %v1024 = vpop.xlane.xlu0 %1023
  %v1025 = vsel %vm430, %v419, 0.0
  %1026 = vadd.xlane.f32.xlu0 %v1025
  %v1027 = vpop.xlane.xlu0 %1026
  %v1028 = vsel %vm430, %v420, 0.0
  %1029 = vadd.xlane.f32.xlu0 %v1028
  %v1030 = vpop.xlane.xlu0 %1029
  %v1031 = vsel %vm430, %v421, 0.0
  %1032 = vadd.xlane.f32.xlu0 %v1031
  %v1033 = vpop.xlane.xlu0 %1032
  %v1034 = vsel %vm430, %v422, 0.0
  %1035 = vadd.xlane.f32.xlu0 %v1034
  %v1036 = vpop.xlane.xlu0 %1035
  %v1037 = vsel %vm430, %v423, 0.0
  %1038 = vadd.xlane.f32.xlu0 %v1037
  %v1039 = vpop.xlane.xlu0 %1038
  %v1040 = vsel %vm430, %v424, 0.0
  %1041 = vadd.xlane.f32.xlu0 %v1040
  %v1042 = vpop.xlane.xlu0 %1041
  %v1043 = vsel %vm430, %v425, 0.0
  %1044 = vadd.xlane.f32.xlu0 %v1043
  %v1045 = vpop.xlane.xlu0 %1044
  %v1046 = vsel %vm430, %v426, 0.0
  %1047 = vadd.xlane.f32.xlu0 %v1046
  %v1048 = vpop.xlane.xlu0 %1047
  %v1049 = vsel %vm430, %v427, 0.0
  %1050 = vadd.xlane.f32.xlu0 %v1049
  %v1051 = vpop.xlane.xlu0 %1050
  %v1052 = vsel %vm430, %v428, 0.0
  %1053 = vadd.xlane.f32.xlu0 %v1052
  %v1054 = vpop.xlane.xlu0 %1053
  %v1263 = vlaneseq
  %v1264 = vand.u32 %v1263, 127
  %v1265 = vperm.slane %v433, %v1264
  %v1266 = vadd.s32 %v1264, 4294967288
  %v1267 = vperm.slane %v436, %v1266
  %vm1268 = vcmask 130112
  %v1269 = vsel %vm1268, %v1267, %v1265
  %v1270 = vadd.s32 %v1264, 4294967280
  %v1271 = vperm.slane %v439, %v1270
  %vm1272 = vcmask 195712
  %v1273 = vsel %vm1272, %v1271, %v1269
  %v1274 = vadd.s32 %v1264, 4294967272
  %v1275 = vperm.slane %v442, %v1274
  %vm1276 = vcmask 261312
  %v1277 = vsel %vm1276, %v1275, %v1273
  %v1278 = vadd.s32 %v1264, 4294967264
  %v1279 = vperm.slane %v445, %v1278
  %vm1280 = vcmask 326912
  %v1281 = vsel %vm1280, %v1279, %v1277
  %v1282 = vadd.s32 %v1264, 4294967256
  %v1283 = vperm.slane %v448, %v1282
  %vm1284 = vcmask 392512
  %v1285 = vsel %vm1284, %v1283, %v1281
  %v1286 = vadd.s32 %v1264, 4294967248
  %v1287 = vperm.slane %v451, %v1286
  %vm1288 = vcmask 458112
  %v1289 = vsel %vm1288, %v1287, %v1285
  %v1290 = vadd.s32 %v1264, 4294967240
  %v1291 = vperm.slane %v454, %v1290
  %vm1292 = vcmask 523712
  %v1293 = vsel %vm1292, %v1291, %v1289
  %v1294 = vadd.s32 %v1264, 4294967232
  %v1295 = vperm.slane %v457, %v1294
  %vm1296 = vcmask 589312
  %v1297 = vsel %vm1296, %v1295, %v1293
  %v1298 = vadd.s32 %v1264, 4294967224
  %v1299 = vperm.slane %v460, %v1298
  %vm1300 = vcmask 654912
  %v1301 = vsel %vm1300, %v1299, %v1297
  %v1302 = vadd.s32 %v1264, 4294967216
  %v1303 = vperm.slane %v463, %v1302
  %vm1304 = vcmask 720512
  %v1305 = vsel %vm1304, %v1303, %v1301
  %v1306 = vadd.s32 %v1264, 4294967208
  %v1307 = vperm.slane %v466, %v1306
  %vm1308 = vcmask 786112
  %v1309 = vsel %vm1308, %v1307, %v1305
  %v1310 = vadd.s32 %v1264, 4294967200
  %v1311 = vperm.slane %v469, %v1310
  %vm1312 = vcmask 851712
  %v1313 = vsel %vm1312, %v1311, %v1309
  %v1314 = vadd.s32 %v1264, 4294967192
  %v1315 = vperm.slane %v472, %v1314
  %vm1316 = vcmask 917312
  %v1317 = vsel %vm1316, %v1315, %v1313
  %v1318 = vadd.s32 %v1264, 4294967184
  %v1319 = vperm.slane %v475, %v1318
  %vm1320 = vcmask 982912
  %v1321 = vsel %vm1320, %v1319, %v1317
  %v1322 = vadd.s32 %v1264, 4294967176
  %v1323 = vperm.slane %v478, %v1322
  %vm1324 = vcmask 1048512
  %v1325 = vsel %vm1324, %v1323, %v1321
  %v1326 = vperm.slane %v481, %v1264
  %v1327 = vperm.slane %v484, %v1266
  %v1328 = vsel %vm1268, %v1327, %v1326
  %v1329 = vperm.slane %v487, %v1270
  %v1330 = vsel %vm1272, %v1329, %v1328
  %v1331 = vperm.slane %v490, %v1274
  %v1332 = vsel %vm1276, %v1331, %v1330
  %v1333 = vperm.slane %v493, %v1278
  %v1334 = vsel %vm1280, %v1333, %v1332
  %v1335 = vperm.slane %v496, %v1282
  %v1336 = vsel %vm1284, %v1335, %v1334
  %v1337 = vperm.slane %v499, %v1286
  %v1338 = vsel %vm1288, %v1337, %v1336
  %v1339 = vperm.slane %v502, %v1290
  %v1340 = vsel %vm1292, %v1339, %v1338
  %v1341 = vperm.slane %v505, %v1294
  %v1342 = vsel %vm1296, %v1341, %v1340
  %v1343 = vperm.slane %v508, %v1298
  %v1344 = vsel %vm1300, %v1343, %v1342
  %v1345 = vperm.slane %v511, %v1302
  %v1346 = vsel %vm1304, %v1345, %v1344
  %v1347 = vperm.slane %v514, %v1306
  %v1348 = vsel %vm1308, %v1347, %v1346
  %v1349 = vperm.slane %v517, %v1310
  %v1350 = vsel %vm1312, %v1349, %v1348
  %v1351 = vperm.slane %v520, %v1314
  %v1352 = vsel %vm1316, %v1351, %v1350
  %v1353 = vperm.slane %v523, %v1318
  %v1354 = vsel %vm1320, %v1353, %v1352
  %v1355 = vperm.slane %v526, %v1322
  %v1356 = vsel %vm1324, %v1355, %v1354
  %v1357 = vperm.slane %v529, %v1264
  %v1358 = vperm.slane %v532, %v1266
  %v1359 = vsel %vm1268, %v1358, %v1357
  %v1360 = vperm.slane %v535, %v1270
  %v1361 = vsel %vm1272, %v1360, %v1359
  %v1362 = vperm.slane %v538, %v1274
  %v1363 = vsel %vm1276, %v1362, %v1361
  %v1364 = vperm.slane %v541, %v1278
  %v1365 = vsel %vm1280, %v1364, %v1363
  %v1366 = vperm.slane %v544, %v1282
  %v1367 = vsel %vm1284, %v1366, %v1365
  %v1368 = vperm.slane %v547, %v1286
  %v1369 = vsel %vm1288, %v1368, %v1367
  %v1370 = vperm.slane %v550, %v1290
  %v1371 = vsel %vm1292, %v1370, %v1369
  %v1372 = vperm.slane %v553, %v1294
  %v1373 = vsel %vm1296, %v1372, %v1371
  %v1374 = vperm.slane %v556, %v1298
  %v1375 = vsel %vm1300, %v1374, %v1373
  %v1376 = vperm.slane %v559, %v1302
  %v1377 = vsel %vm1304, %v1376, %v1375
  %v1378 = vperm.slane %v562, %v1306
  %v1379 = vsel %vm1308, %v1378, %v1377
  %v1380 = vperm.slane %v565, %v1310
  %v1381 = vsel %vm1312, %v1380, %v1379
  %v1382 = vperm.slane %v568, %v1314
  %v1383 = vsel %vm1316, %v1382, %v1381
  %v1384 = vperm.slane %v571, %v1318
  %v1385 = vsel %vm1320, %v1384, %v1383
  %v1386 = vperm.slane %v574, %v1322
  %v1387 = vsel %vm1324, %v1386, %v1385
  %v1388 = vperm.slane %v577, %v1264
  %v1389 = vperm.slane %v580, %v1266
  %v1390 = vsel %vm1268, %v1389, %v1388
  %v1391 = vperm.slane %v583, %v1270
  %v1392 = vsel %vm1272, %v1391, %v1390
  %v1393 = vperm.slane %v586, %v1274
  %v1394 = vsel %vm1276, %v1393, %v1392
  %v1395 = vperm.slane %v589, %v1278
  %v1396 = vsel %vm1280, %v1395, %v1394
  %v1397 = vperm.slane %v592, %v1282
  %v1398 = vsel %vm1284, %v1397, %v1396
  %v1399 = vperm.slane %v595, %v1286
  %v1400 = vsel %vm1288, %v1399, %v1398
  %v1401 = vperm.slane %v598, %v1290
  %v1402 = vsel %vm1292, %v1401, %v1400
  %v1403 = vperm.slane %v601, %v1294
  %v1404 = vsel %vm1296, %v1403, %v1402
  %v1405 = vperm.slane %v604, %v1298
  %v1406 = vsel %vm1300, %v1405, %v1404
  %v1407 = vperm.slane %v607, %v1302
  %v1408 = vsel %vm1304, %v1407, %v1406
  %v1409 = vperm.slane %v610, %v1306
  %v1410 = vsel %vm1308, %v1409, %v1408
  %v1411 = vperm.slane %v613, %v1310
  %v1412 = vsel %vm1312, %v1411, %v1410
  %v1413 = vperm.slane %v616, %v1314
  %v1414 = vsel %vm1316, %v1413, %v1412
  %v1415 = vperm.slane %v619, %v1318
  %v1416 = vsel %vm1320, %v1415, %v1414
  %v1417 = vperm.slane %v622, %v1322
  %v1418 = vsel %vm1324, %v1417, %v1416
  %v1419 = vperm.slane %v625, %v1264
  %v1420 = vperm.slane %v628, %v1266
  %v1421 = vsel %vm1268, %v1420, %v1419
  %v1422 = vperm.slane %v631, %v1270
  %v1423 = vsel %vm1272, %v1422, %v1421
  %v1424 = vperm.slane %v634, %v1274
  %v1425 = vsel %vm1276, %v1424, %v1423
  %v1426 = vperm.slane %v637, %v1278
  %v1427 = vsel %vm1280, %v1426, %v1425
  %v1428 = vperm.slane %v640, %v1282
  %v1429 = vsel %vm1284, %v1428, %v1427
  %v1430 = vperm.slane %v643, %v1286
  %v1431 = vsel %vm1288, %v1430, %v1429
  %v1432 = vperm.slane %v646, %v1290
  %v1433 = vsel %vm1292, %v1432, %v1431
  %v1434 = vperm.slane %v649, %v1294
  %v1435 = vsel %vm1296, %v1434, %v1433
  %v1436 = vperm.slane %v652, %v1298
  %v1437 = vsel %vm1300, %v1436, %v1435
  %v1438 = vperm.slane %v655, %v1302
  %v1439 = vsel %vm1304, %v1438, %v1437
  %v1440 = vperm.slane %v658, %v1306
  %v1441 = vsel %vm1308, %v1440, %v1439
  %v1442 = vperm.slane %v661, %v1310
  %v1443 = vsel %vm1312, %v1442, %v1441
  %v1444 = vperm.slane %v664, %v1314
  %v1445 = vsel %vm1316, %v1444, %v1443
  %v1446 = vperm.slane %v667, %v1318
  %v1447 = vsel %vm1320, %v1446, %v1445
  %v1448 = vperm.slane %v670, %v1322
  %v1449 = vsel %vm1324, %v1448, %v1447
  %v1450 = vperm.slane %v673, %v1264
  %v1451 = vperm.slane %v676, %v1266
  %v1452 = vsel %vm1268, %v1451, %v1450
  %v1453 = vperm.slane %v679, %v1270
  %v1454 = vsel %vm1272, %v1453, %v1452
  %v1455 = vperm.slane %v682, %v1274
  %v1456 = vsel %vm1276, %v1455, %v1454
  %v1457 = vperm.slane %v685, %v1278
  %v1458 = vsel %vm1280, %v1457, %v1456
  %v1459 = vperm.slane %v688, %v1282
  %v1460 = vsel %vm1284, %v1459, %v1458
  %v1461 = vperm.slane %v691, %v1286
  %v1462 = vsel %vm1288, %v1461, %v1460
  %v1463 = vperm.slane %v694, %v1290
  %v1464 = vsel %vm1292, %v1463, %v1462
  %v1465 = vperm.slane %v697, %v1294
  %v1466 = vsel %vm1296, %v1465, %v1464
  %v1467 = vperm.slane %v700, %v1298
  %v1468 = vsel %vm1300, %v1467, %v1466
  %v1469 = vperm.slane %v703, %v1302
  %v1470 = vsel %vm1304, %v1469, %v1468
  %v1471 = vperm.slane %v706, %v1306
  %v1472 = vsel %vm1308, %v1471, %v1470
  %v1473 = vperm.slane %v709, %v1310
  %v1474 = vsel %vm1312, %v1473, %v1472
  %v1475 = vperm.slane %v712, %v1314
  %v1476 = vsel %vm1316, %v1475, %v1474
  %v1477 = vperm.slane %v715, %v1318
  %v1478 = vsel %vm1320, %v1477, %v1476
  %v1479 = vperm.slane %v718, %v1322
  %v1480 = vsel %vm1324, %v1479, %v1478
  %v1481 = vperm.slane %v721, %v1264
  %v1482 = vperm.slane %v724, %v1266
  %v1483 = vsel %vm1268, %v1482, %v1481
  %v1484 = vperm.slane %v727, %v1270
  %v1485 = vsel %vm1272, %v1484, %v1483
  %v1486 = vperm.slane %v730, %v1274
  %v1487 = vsel %vm1276, %v1486, %v1485
  %v1488 = vperm.slane %v733, %v1278
  %v1489 = vsel %vm1280, %v1488, %v1487
  %v1490 = vperm.slane %v736, %v1282
  %v1491 = vsel %vm1284, %v1490, %v1489
  %v1492 = vperm.slane %v739, %v1286
  %v1493 = vsel %vm1288, %v1492, %v1491
  %v1494 = vperm.slane %v742, %v1290
  %v1495 = vsel %vm1292, %v1494, %v1493
  %v1496 = vperm.slane %v745, %v1294
  %v1497 = vsel %vm1296, %v1496, %v1495
  %v1498 = vperm.slane %v748, %v1298
  %v1499 = vsel %vm1300, %v1498, %v1497
  %v1500 = vperm.slane %v751, %v1302
  %v1501 = vsel %vm1304, %v1500, %v1499
  %v1502 = vperm.slane %v754, %v1306
  %v1503 = vsel %vm1308, %v1502, %v1501
  %v1504 = vperm.slane %v757, %v1310
  %v1505 = vsel %vm1312, %v1504, %v1503
  %v1506 = vperm.slane %v760, %v1314
  %v1507 = vsel %vm1316, %v1506, %v1505
  %v1508 = vperm.slane %v763, %v1318
  %v1509 = vsel %vm1320, %v1508, %v1507
  %v1510 = vperm.slane %v766, %v1322
  %v1511 = vsel %vm1324, %v1510, %v1509
  %v1512 = vperm.slane %v769, %v1264
  %v1513 = vperm.slane %v772, %v1266
  %v1514 = vsel %vm1268, %v1513, %v1512
  %v1515 = vperm.slane %v775, %v1270
  %v1516 = vsel %vm1272, %v1515, %v1514
  %v1517 = vperm.slane %v778, %v1274
  %v1518 = vsel %vm1276, %v1517, %v1516
  %v1519 = vperm.slane %v781, %v1278
  %v1520 = vsel %vm1280, %v1519, %v1518
  %v1521 = vperm.slane %v784, %v1282
  %v1522 = vsel %vm1284, %v1521, %v1520
  %v1523 = vperm.slane %v787, %v1286
  %v1524 = vsel %vm1288, %v1523, %v1522
  %v1525 = vperm.slane %v790, %v1290
  %v1526 = vsel %vm1292, %v1525, %v1524
  %v1527 = vperm.slane %v793, %v1294
  %v1528 = vsel %vm1296, %v1527, %v1526
  %v1529 = vperm.slane %v796, %v1298
  %v1530 = vsel %vm1300, %v1529, %v1528
  %v1531 = vperm.slane %v799, %v1302
  %v1532 = vsel %vm1304, %v1531, %v1530
  %v1533 = vperm.slane %v802, %v1306
  %v1534 = vsel %vm1308, %v1533, %v1532
  %v1535 = vperm.slane %v805, %v1310
  %v1536 = vsel %vm1312, %v1535, %v1534
  %v1537 = vperm.slane %v808, %v1314
  %v1538 = vsel %vm1316, %v1537, %v1536
  %v1539 = vperm.slane %v811, %v1318
  %v1540 = vsel %vm1320, %v1539, %v1538
  %v1541 = vperm.slane %v814, %v1322
  %v1542 = vsel %vm1324, %v1541, %v1540
  %v1543 = vperm.slane %v817, %v1264
  %v1544 = vperm.slane %v820, %v1266
  %v1545 = vsel %vm1268, %v1544, %v1543
  %v1546 = vperm.slane %v823, %v1270
  %v1547 = vsel %vm1272, %v1546, %v1545
  %v1548 = vperm.slane %v826, %v1274
  %v1549 = vsel %vm1276, %v1548, %v1547
  %v1550 = vperm.slane %v829, %v1278
  %v1551 = vsel %vm1280, %v1550, %v1549
  %v1552 = vperm.slane %v832, %v1282
  %v1553 = vsel %vm1284, %v1552, %v1551
  %v1554 = vperm.slane %v835, %v1286
  %v1555 = vsel %vm1288, %v1554, %v1553
  %v1556 = vperm.slane %v838, %v1290
  %v1557 = vsel %vm1292, %v1556, %v1555
  %v1558 = vperm.slane %v841, %v1294
  %v1559 = vsel %vm1296, %v1558, %v1557
  %v1560 = vperm.slane %v844, %v1298
  %v1561 = vsel %vm1300, %v1560, %v1559
  %v1562 = vperm.slane %v847, %v1302
  %v1563 = vsel %vm1304, %v1562, %v1561
  %v1564 = vperm.slane %v850, %v1306
  %v1565 = vsel %vm1308, %v1564, %v1563
  %v1566 = vperm.slane %v853, %v1310
  %v1567 = vsel %vm1312, %v1566, %v1565
  %v1568 = vperm.slane %v856, %v1314
  %v1569 = vsel %vm1316, %v1568, %v1567
  %v1570 = vperm.slane %v859, %v1318
  %v1571 = vsel %vm1320, %v1570, %v1569
  %v1572 = vperm.slane %v862, %v1322
  %v1573 = vsel %vm1324, %v1572, %v1571
  %v1574 = vperm.slane %v865, %v1264
  %v1575 = vperm.slane %v868, %v1266
  %v1576 = vsel %vm1268, %v1575, %v1574
  %v1577 = vperm.slane %v871, %v1270
  %v1578 = vsel %vm1272, %v1577, %v1576
  %v1579 = vperm.slane %v874, %v1274
  %v1580 = vsel %vm1276, %v1579, %v1578
  %v1581 = vperm.slane %v877, %v1278
  %v1582 = vsel %vm1280, %v1581, %v1580
  %v1583 = vperm.slane %v880, %v1282
  %v1584 = vsel %vm1284, %v1583, %v1582
  %v1585 = vperm.slane %v883, %v1286
  %v1586 = vsel %vm1288, %v1585, %v1584
  %v1587 = vperm.slane %v886, %v1290
  %v1588 = vsel %vm1292, %v1587, %v1586
  %v1589 = vperm.slane %v889, %v1294
  %v1590 = vsel %vm1296, %v1589, %v1588
  %v1591 = vperm.slane %v892, %v1298
  %v1592 = vsel %vm1300, %v1591, %v1590
  %v1593 = vperm.slane %v895, %v1302
  %v1594 = vsel %vm1304, %v1593, %v1592
  %v1595 = vperm.slane %v898, %v1306
  %v1596 = vsel %vm1308, %v1595, %v1594
  %v1597 = vperm.slane %v901, %v1310
  %v1598 = vsel %vm1312, %v1597, %v1596
  %v1599 = vperm.slane %v904, %v1314
  %v1600 = vsel %vm1316, %v1599, %v1598
  %v1601 = vperm.slane %v907, %v1318
  %v1602 = vsel %vm1320, %v1601, %v1600
  %v1603 = vperm.slane %v910, %v1322
  %v1604 = vsel %vm1324, %v1603, %v1602
  %v1605 = vperm.slane %v913, %v1264
  %v1606 = vperm.slane %v916, %v1266
  %v1607 = vsel %vm1268, %v1606, %v1605
  %v1608 = vperm.slane %v919, %v1270
  %v1609 = vsel %vm1272, %v1608, %v1607
  %v1610 = vperm.slane %v922, %v1274
  %v1611 = vsel %vm1276, %v1610, %v1609
  %v1612 = vperm.slane %v925, %v1278
  %v1613 = vsel %vm1280, %v1612, %v1611
  %v1614 = vperm.slane %v928, %v1282
  %v1615 = vsel %vm1284, %v1614, %v1613
  %v1616 = vperm.slane %v931, %v1286
  %v1617 = vsel %vm1288, %v1616, %v1615
  %v1618 = vperm.slane %v934, %v1290
  %v1619 = vsel %vm1292, %v1618, %v1617
  %v1620 = vperm.slane %v937, %v1294
  %v1621 = vsel %vm1296, %v1620, %v1619
  %v1622 = vperm.slane %v940, %v1298
  %v1623 = vsel %vm1300, %v1622, %v1621
  %v1624 = vperm.slane %v943, %v1302
  %v1625 = vsel %vm1304, %v1624, %v1623
  %v1626 = vperm.slane %v946, %v1306
  %v1627 = vsel %vm1308, %v1626, %v1625
  %v1628 = vperm.slane %v949, %v1310
  %v1629 = vsel %vm1312, %v1628, %v1627
  %v1630 = vperm.slane %v952, %v1314
  %v1631 = vsel %vm1316, %v1630, %v1629
  %v1632 = vperm.slane %v955, %v1318
  %v1633 = vsel %vm1320, %v1632, %v1631
  %v1634 = vperm.slane %v958, %v1322
  %v1635 = vsel %vm1324, %v1634, %v1633
  %v1636 = vperm.slane %v961, %v1264
  %v1637 = vperm.slane %v964, %v1266
  %v1638 = vsel %vm1268, %v1637, %v1636
  %v1639 = vperm.slane %v967, %v1270
  %v1640 = vsel %vm1272, %v1639, %v1638
  %v1641 = vperm.slane %v970, %v1274
  %v1642 = vsel %vm1276, %v1641, %v1640
  %v1643 = vperm.slane %v973, %v1278
  %v1644 = vsel %vm1280, %v1643, %v1642
  %v1645 = vperm.slane %v976, %v1282
  %v1646 = vsel %vm1284, %v1645, %v1644
  %v1647 = vperm.slane %v979, %v1286
  %v1648 = vsel %vm1288, %v1647, %v1646
  %v1649 = vperm.slane %v982, %v1290
  %v1650 = vsel %vm1292, %v1649, %v1648
  %v1651 = vperm.slane %v985, %v1294
  %v1652 = vsel %vm1296, %v1651, %v1650
  %v1653 = vperm.slane %v988, %v1298
  %v1654 = vsel %vm1300, %v1653, %v1652
  %v1655 = vperm.slane %v991, %v1302
  %v1656 = vsel %vm1304, %v1655, %v1654
  %v1657 = vperm.slane %v994, %v1306
  %v1658 = vsel %vm1308, %v1657, %v1656
  %v1659 = vperm.slane %v997, %v1310
  %v1660 = vsel %vm1312, %v1659, %v1658
  %v1661 = vperm.slane %v1000, %v1314
  %v1662 = vsel %vm1316, %v1661, %v1660
  %v1663 = vperm.slane %v1003, %v1318
  %v1664 = vsel %vm1320, %v1663, %v1662
  %v1665 = vperm.slane %v1006, %v1322
  %v1666 = vsel %vm1324, %v1665, %v1664
  %v1667 = vperm.slane %v1009, %v1264
  %v1668 = vperm.slane %v1012, %v1266
  %v1669 = vsel %vm1268, %v1668, %v1667
  %v1670 = vperm.slane %v1015, %v1270
  %v1671 = vsel %vm1272, %v1670, %v1669
  %v1672 = vperm.slane %v1018, %v1274
  %v1673 = vsel %vm1276, %v1672, %v1671
  %v1674 = vperm.slane %v1021, %v1278
  %v1675 = vsel %vm1280, %v1674, %v1673
  %v1676 = vperm.slane %v1024, %v1282
  %v1677 = vsel %vm1284, %v1676, %v1675
  %v1678 = vperm.slane %v1027, %v1286
  %v1679 = vsel %vm1288, %v1678, %v1677
  %v1680 = vperm.slane %v1030, %v1290
  %v1681 = vsel %vm1292, %v1680, %v1679
  %v1682 = vperm.slane %v1033, %v1294
  %v1683 = vsel %vm1296, %v1682, %v1681
  %v1684 = vperm.slane %v1036, %v1298
  %v1685 = vsel %vm1300, %v1684, %v1683
  %v1686 = vperm.slane %v1039, %v1302
  %v1687 = vsel %vm1304, %v1686, %v1685
  %v1688 = vperm.slane %v1042, %v1306
  %v1689 = vsel %vm1308, %v1688, %v1687
  %v1690 = vperm.slane %v1045, %v1310
  %v1691 = vsel %vm1312, %v1690, %v1689
  %v1692 = vperm.slane %v1048, %v1314
  %v1693 = vsel %vm1316, %v1692, %v1691
  %v1694 = vperm.slane %v1051, %v1318
  %v1695 = vsel %vm1320, %v1694, %v1693
  %v1696 = vperm.slane %v1054, %v1322
  %v1697 = vsel %vm1324, %v1696, %v1695
  %vm1698 = vcmask 1041409
  %v1699 = vsel %vm1698, %v1356, %v1325
  %vm1700 = vcmask 1042434
  %v1701 = vsel %vm1700, %v1387, %v1699
  %vm1702 = vcmask 1043459
  %v1703 = vsel %vm1702, %v1418, %v1701
  %vm1704 = vcmask 1044484
  %v1705 = vsel %vm1704, %v1449, %v1703
  %vm1706 = vcmask 1045509
  %v1707 = vsel %vm1706, %v1480, %v1705
  %vm1708 = vcmask 1046534
  %v1709 = vsel %vm1708, %v1511, %v1707
  %vm1710 = vcmask 1047559
  %v1711 = vsel %vm1710, %v1542, %v1709
  %v1712 = vsel %vm1698, %v1604, %v1573
  %v1713 = vsel %vm1700, %v1635, %v1712
  %v1714 = vsel %vm1702, %v1666, %v1713
  %v1715 = vsel %vm1704, %v1697, %v1714
  %1718 = vst [vmem:[%s2] sm:$0xff] %v1711
  %1719 = vst [vmem:[%s2 + $0x8] sm:$0x1f] %v1715
  %v1721 = vperm.slane %v429, 0
  %v1723 = vmul.f32 %v221, %v1721
  %v1724 = vmul.f32 %v222, %v1721
  %v1725 = vmul.f32 %v223, %v1721
  %v1726 = vmul.f32 %v224, %v1721
  %v1727 = vmul.f32 %v225, %v1721
  %v1728 = vmul.f32 %v226, %v1721
  %v1729 = vmul.f32 %v227, %v1721
  %v1730 = vmul.f32 %v228, %v1721
  %v1731 = vmul.f32 %v229, %v1721
  %v1732 = vmul.f32 %v230, %v1721
  %v1733 = vmul.f32 %v231, %v1721
  %v1734 = vmul.f32 %v232, %v1721
  %v1735 = vmul.f32 %v233, %v1721
  %v1736 = vmul.f32 %v234, %v1721
  %v1737 = vmul.f32 %v235, %v1721
  %v1738 = vmul.f32 %v236, %v1721
  %v1739 = vmul.f32 %v237, %v1721
  %v1740 = vmul.f32 %v238, %v1721
  %v1741 = vmul.f32 %v239, %v1721
  %v1742 = vmul.f32 %v240, %v1721
  %v1743 = vmul.f32 %v241, %v1721
  %v1744 = vmul.f32 %v242, %v1721
  %v1745 = vmul.f32 %v243, %v1721
  %v1746 = vmul.f32 %v244, %v1721
  %v1747 = vmul.f32 %v245, %v1721
  %v1748 = vmul.f32 %v246, %v1721
  %v1749 = vmul.f32 %v247, %v1721
  %v1750 = vmul.f32 %v248, %v1721
  %v1751 = vmul.f32 %v249, %v1721
  %v1752 = vmul.f32 %v250, %v1721
  %v1753 = vmul.f32 %v251, %v1721
  %v1754 = vmul.f32 %v252, %v1721
  %v1755 = vmul.f32 %v253, %v1721
  %v1756 = vmul.f32 %v254, %v1721
  %v1757 = vmul.f32 %v255, %v1721
  %v1758 = vmul.f32 %v256, %v1721
  %v1759 = vmul.f32 %v257, %v1721
  %v1760 = vmul.f32 %v258, %v1721
  %v1761 = vmul.f32 %v259, %v1721
  %v1762 = vmul.f32 %v260, %v1721
  %v1763 = vmul.f32 %v261, %v1721
  %v1764 = vmul.f32 %v262, %v1721
  %v1765 = vmul.f32 %v263, %v1721
  %v1766 = vmul.f32 %v264, %v1721
  %v1767 = vmul.f32 %v265, %v1721
  %v1768 = vmul.f32 %v266, %v1721
  %v1769 = vmul.f32 %v267, %v1721
  %v1770 = vmul.f32 %v268, %v1721
  %v1771 = vmul.f32 %v269, %v1721
  %v1772 = vmul.f32 %v270, %v1721
  %v1773 = vmul.f32 %v271, %v1721
  %v1774 = vmul.f32 %v272, %v1721
  %v1775 = vmul.f32 %v273, %v1721
  %v1776 = vmul.f32 %v274, %v1721
  %v1777 = vmul.f32 %v275, %v1721
  %v1778 = vmul.f32 %v276, %v1721
  %v1779 = vmul.f32 %v277, %v1721
  %v1780 = vmul.f32 %v278, %v1721
  %v1781 = vmul.f32 %v279, %v1721
  %v1782 = vmul.f32 %v280, %v1721
  %v1783 = vmul.f32 %v281, %v1721
  %v1784 = vmul.f32 %v282, %v1721
  %v1785 = vmul.f32 %v283, %v1721
  %v1786 = vmul.f32 %v284, %v1721
  %v1787 = vmul.f32 %v285, %v1721
  %v1788 = vmul.f32 %v286, %v1721
  %v1789 = vmul.f32 %v287, %v1721
  %v1790 = vmul.f32 %v288, %v1721
  %v1791 = vmul.f32 %v289, %v1721
  %v1792 = vmul.f32 %v290, %v1721
  %v1793 = vmul.f32 %v291, %v1721
  %v1794 = vmul.f32 %v292, %v1721
  %v1795 = vmul.f32 %v293, %v1721
  %v1796 = vmul.f32 %v294, %v1721
  %v1797 = vmul.f32 %v295, %v1721
  %v1798 = vmul.f32 %v296, %v1721
  %v1799 = vmul.f32 %v297, %v1721
  %v1800 = vmul.f32 %v298, %v1721
  %v1801 = vmul.f32 %v299, %v1721
  %v1802 = vmul.f32 %v300, %v1721
  %v1803 = vmul.f32 %v301, %v1721
  %v1804 = vmul.f32 %v302, %v1721
  %v1805 = vmul.f32 %v303, %v1721
  %v1806 = vmul.f32 %v304, %v1721
  %v1807 = vmul.f32 %v305, %v1721
  %v1808 = vmul.f32 %v306, %v1721
  %v1809 = vmul.f32 %v307, %v1721
  %v1810 = vmul.f32 %v308, %v1721
  %v1811 = vmul.f32 %v309, %v1721
  %v1812 = vmul.f32 %v310, %v1721
  %v1813 = vmul.f32 %v311, %v1721
  %v1814 = vmul.f32 %v312, %v1721
  %v1815 = vmul.f32 %v313, %v1721
  %v1816 = vmul.f32 %v314, %v1721
  %v1817 = vmul.f32 %v315, %v1721
  %v1818 = vmul.f32 %v316, %v1721
  %v1819 = vmul.f32 %v317, %v1721
  %v1820 = vmul.f32 %v318, %v1721
  %v1821 = vmul.f32 %v319, %v1721
  %v1822 = vmul.f32 %v320, %v1721
  %v1823 = vmul.f32 %v321, %v1721
  %v1824 = vmul.f32 %v322, %v1721
  %v1825 = vmul.f32 %v323, %v1721
  %v1826 = vmul.f32 %v324, %v1721
  %v1827 = vmul.f32 %v325, %v1721
  %v1828 = vmul.f32 %v326, %v1721
  %v1829 = vmul.f32 %v327, %v1721
  %v1830 = vmul.f32 %v328, %v1721
  %v1831 = vmul.f32 %v329, %v1721
  %v1832 = vmul.f32 %v330, %v1721
  %v1833 = vmul.f32 %v331, %v1721
  %v1834 = vmul.f32 %v332, %v1721
  %v1835 = vmul.f32 %v333, %v1721
  %v1836 = vmul.f32 %v334, %v1721
  %v1837 = vmul.f32 %v335, %v1721
  %v1838 = vmul.f32 %v336, %v1721
  %v1839 = vmul.f32 %v337, %v1721
  %v1840 = vmul.f32 %v338, %v1721
  %v1841 = vmul.f32 %v339, %v1721
  %v1842 = vmul.f32 %v340, %v1721
  %v1843 = vmul.f32 %v341, %v1721
  %v1844 = vmul.f32 %v342, %v1721
  %v1845 = vmul.f32 %v343, %v1721
  %v1846 = vmul.f32 %v344, %v1721
  %v1847 = vmul.f32 %v345, %v1721
  %v1848 = vmul.f32 %v346, %v1721
  %v1849 = vmul.f32 %v347, %v1721
  %v1850 = vmul.f32 %v348, %v1721
  %v1851 = vmul.f32 %v349, %v1721
  %v1852 = vmul.f32 %v350, %v1721
  %v1853 = vmul.f32 %v351, %v1721
  %v1854 = vmul.f32 %v352, %v1721
  %v1855 = vmul.f32 %v353, %v1721
  %v1856 = vmul.f32 %v354, %v1721
  %v1857 = vmul.f32 %v355, %v1721
  %v1858 = vmul.f32 %v356, %v1721
  %v1859 = vmul.f32 %v357, %v1721
  %v1860 = vmul.f32 %v358, %v1721
  %v1861 = vmul.f32 %v359, %v1721
  %v1862 = vmul.f32 %v360, %v1721
  %v1863 = vmul.f32 %v361, %v1721
  %v1864 = vmul.f32 %v362, %v1721
  %v1865 = vmul.f32 %v363, %v1721
  %v1866 = vmul.f32 %v364, %v1721
  %v1867 = vmul.f32 %v365, %v1721
  %v1868 = vmul.f32 %v366, %v1721
  %v1869 = vmul.f32 %v367, %v1721
  %v1870 = vmul.f32 %v368, %v1721
  %v1871 = vmul.f32 %v369, %v1721
  %v1872 = vmul.f32 %v370, %v1721
  %v1873 = vmul.f32 %v371, %v1721
  %v1874 = vmul.f32 %v372, %v1721
  %v1875 = vmul.f32 %v373, %v1721
  %v1876 = vmul.f32 %v374, %v1721
  %v1877 = vmul.f32 %v375, %v1721
  %v1878 = vmul.f32 %v376, %v1721
  %v1879 = vmul.f32 %v377, %v1721
  %v1880 = vmul.f32 %v378, %v1721
  %v1881 = vmul.f32 %v379, %v1721
  %v1882 = vmul.f32 %v380, %v1721
  %v1883 = vmul.f32 %v381, %v1721
  %v1884 = vmul.f32 %v382, %v1721
  %v1885 = vmul.f32 %v383, %v1721
  %v1886 = vmul.f32 %v384, %v1721
  %v1887 = vmul.f32 %v385, %v1721
  %v1888 = vmul.f32 %v386, %v1721
  %v1889 = vmul.f32 %v387, %v1721
  %v1890 = vmul.f32 %v388, %v1721
  %v1891 = vmul.f32 %v389, %v1721
  %v1892 = vmul.f32 %v390, %v1721
  %v1893 = vmul.f32 %v391, %v1721
  %v1894 = vmul.f32 %v392, %v1721
  %v1895 = vmul.f32 %v393, %v1721
  %v1896 = vmul.f32 %v394, %v1721
  %v1897 = vmul.f32 %v395, %v1721
  %v1898 = vmul.f32 %v396, %v1721
  %v1899 = vmul.f32 %v397, %v1721
  %v1900 = vmul.f32 %v398, %v1721
  %v1901 = vmul.f32 %v399, %v1721
  %v1902 = vmul.f32 %v400, %v1721
  %v1903 = vmul.f32 %v401, %v1721
  %v1904 = vmul.f32 %v402, %v1721
  %v1905 = vmul.f32 %v403, %v1721
  %v1906 = vmul.f32 %v404, %v1721
  %v1907 = vmul.f32 %v405, %v1721
  %v1908 = vmul.f32 %v406, %v1721
  %v1909 = vmul.f32 %v407, %v1721
  %v1910 = vmul.f32 %v408, %v1721
  %v1911 = vmul.f32 %v409, %v1721
  %v1912 = vmul.f32 %v410, %v1721
  %v1913 = vmul.f32 %v411, %v1721
  %v1914 = vmul.f32 %v412, %v1721
  %v1915 = vmul.f32 %v413, %v1721
  %v1916 = vmul.f32 %v414, %v1721
  %v1917 = vmul.f32 %v415, %v1721
  %v1918 = vmul.f32 %v416, %v1721
  %v1919 = vmul.f32 %v417, %v1721
  %v1920 = vmul.f32 %v418, %v1721
  %v1921 = vmul.f32 %v419, %v1721
  %v1922 = vmul.f32 %v420, %v1721
  %v1923 = vmul.f32 %v421, %v1721
  %v1924 = vmul.f32 %v422, %v1721
  %v1925 = vmul.f32 %v423, %v1721
  %v1926 = vmul.f32 %v424, %v1721
  %v1927 = vmul.f32 %v425, %v1721
  %v1928 = vmul.f32 %v426, %v1721
  %v1929 = vmul.f32 %v427, %v1721
  %v1930 = vmul.f32 %v428, %v1721
  %v1931 = vsel %vm430, %v1723, 0.0
  %1932 = vadd.xlane.f32.xlu0 %v1931
  %v1933 = vpop.xlane.xlu0 %1932
  %v1934 = vsel %vm430, %v1724, 0.0
  %1935 = vadd.xlane.f32.xlu0 %v1934
  %v1936 = vpop.xlane.xlu0 %1935
  %v1937 = vsel %vm430, %v1725, 0.0
  %1938 = vadd.xlane.f32.xlu0 %v1937
  %v1939 = vpop.xlane.xlu0 %1938
  %v1940 = vsel %vm430, %v1726, 0.0
  %1941 = vadd.xlane.f32.xlu0 %v1940
  %v1942 = vpop.xlane.xlu0 %1941
  %v1943 = vsel %vm430, %v1727, 0.0
  %1944 = vadd.xlane.f32.xlu0 %v1943
  %v1945 = vpop.xlane.xlu0 %1944
  %v1946 = vsel %vm430, %v1728, 0.0
  %1947 = vadd.xlane.f32.xlu0 %v1946
  %v1948 = vpop.xlane.xlu0 %1947
  %v1949 = vsel %vm430, %v1729, 0.0
  %1950 = vadd.xlane.f32.xlu0 %v1949
  %v1951 = vpop.xlane.xlu0 %1950
  %v1952 = vsel %vm430, %v1730, 0.0
  %1953 = vadd.xlane.f32.xlu0 %v1952
  %v1954 = vpop.xlane.xlu0 %1953
  %v1955 = vsel %vm430, %v1731, 0.0
  %1956 = vadd.xlane.f32.xlu0 %v1955
  %v1957 = vpop.xlane.xlu0 %1956
  %v1958 = vsel %vm430, %v1732, 0.0
  %1959 = vadd.xlane.f32.xlu0 %v1958
  %v1960 = vpop.xlane.xlu0 %1959
  %v1961 = vsel %vm430, %v1733, 0.0
  %1962 = vadd.xlane.f32.xlu0 %v1961
  %v1963 = vpop.xlane.xlu0 %1962
  %v1964 = vsel %vm430, %v1734, 0.0
  %1965 = vadd.xlane.f32.xlu0 %v1964
  %v1966 = vpop.xlane.xlu0 %1965
  %v1967 = vsel %vm430, %v1735, 0.0
  %1968 = vadd.xlane.f32.xlu0 %v1967
  %v1969 = vpop.xlane.xlu0 %1968
  %v1970 = vsel %vm430, %v1736, 0.0
  %1971 = vadd.xlane.f32.xlu0 %v1970
  %v1972 = vpop.xlane.xlu0 %1971
  %v1973 = vsel %vm430, %v1737, 0.0
  %1974 = vadd.xlane.f32.xlu0 %v1973
  %v1975 = vpop.xlane.xlu0 %1974
  %v1976 = vsel %vm430, %v1738, 0.0
  %1977 = vadd.xlane.f32.xlu0 %v1976
  %v1978 = vpop.xlane.xlu0 %1977
  %v1979 = vsel %vm430, %v1739, 0.0
  %1980 = vadd.xlane.f32.xlu0 %v1979
  %v1981 = vpop.xlane.xlu0 %1980
  %v1982 = vsel %vm430, %v1740, 0.0
  %1983 = vadd.xlane.f32.xlu0 %v1982
  %v1984 = vpop.xlane.xlu0 %1983
  %v1985 = vsel %vm430, %v1741, 0.0
  %1986 = vadd.xlane.f32.xlu0 %v1985
  %v1987 = vpop.xlane.xlu0 %1986
  %v1988 = vsel %vm430, %v1742, 0.0
  %1989 = vadd.xlane.f32.xlu0 %v1988
  %v1990 = vpop.xlane.xlu0 %1989
  %v1991 = vsel %vm430, %v1743, 0.0
  %1992 = vadd.xlane.f32.xlu0 %v1991
  %v1993 = vpop.xlane.xlu0 %1992
  %v1994 = vsel %vm430, %v1744, 0.0
  %1995 = vadd.xlane.f32.xlu0 %v1994
  %v1996 = vpop.xlane.xlu0 %1995
  %v1997 = vsel %vm430, %v1745, 0.0
  %1998 = vadd.xlane.f32.xlu0 %v1997
  %v1999 = vpop.xlane.xlu0 %1998
  %v2000 = vsel %vm430, %v1746, 0.0
  %2001 = vadd.xlane.f32.xlu0 %v2000
  %v2002 = vpop.xlane.xlu0 %2001
  %v2003 = vsel %vm430, %v1747, 0.0
  %2004 = vadd.xlane.f32.xlu0 %v2003
  %v2005 = vpop.xlane.xlu0 %2004
  %v2006 = vsel %vm430, %v1748, 0.0
  %2007 = vadd.xlane.f32.xlu0 %v2006
  %v2008 = vpop.xlane.xlu0 %2007
  %v2009 = vsel %vm430, %v1749, 0.0
  %2010 = vadd.xlane.f32.xlu0 %v2009
  %v2011 = vpop.xlane.xlu0 %2010
  %v2012 = vsel %vm430, %v1750, 0.0
  %2013 = vadd.xlane.f32.xlu0 %v2012
  %v2014 = vpop.xlane.xlu0 %2013
  %v2015 = vsel %vm430, %v1751, 0.0
  %2016 = vadd.xlane.f32.xlu0 %v2015
  %v2017 = vpop.xlane.xlu0 %2016
  %v2018 = vsel %vm430, %v1752, 0.0
  %2019 = vadd.xlane.f32.xlu0 %v2018
  %v2020 = vpop.xlane.xlu0 %2019
  %v2021 = vsel %vm430, %v1753, 0.0
  %2022 = vadd.xlane.f32.xlu0 %v2021
  %v2023 = vpop.xlane.xlu0 %2022
  %v2024 = vsel %vm430, %v1754, 0.0
  %2025 = vadd.xlane.f32.xlu0 %v2024
  %v2026 = vpop.xlane.xlu0 %2025
  %v2027 = vsel %vm430, %v1755, 0.0
  %2028 = vadd.xlane.f32.xlu0 %v2027
  %v2029 = vpop.xlane.xlu0 %2028
  %v2030 = vsel %vm430, %v1756, 0.0
  %2031 = vadd.xlane.f32.xlu0 %v2030
  %v2032 = vpop.xlane.xlu0 %2031
  %v2033 = vsel %vm430, %v1757, 0.0
  %2034 = vadd.xlane.f32.xlu0 %v2033
  %v2035 = vpop.xlane.xlu0 %2034
  %v2036 = vsel %vm430, %v1758, 0.0
  %2037 = vadd.xlane.f32.xlu0 %v2036
  %v2038 = vpop.xlane.xlu0 %2037
  %v2039 = vsel %vm430, %v1759, 0.0
  %2040 = vadd.xlane.f32.xlu0 %v2039
  %v2041 = vpop.xlane.xlu0 %2040
  %v2042 = vsel %vm430, %v1760, 0.0
  %2043 = vadd.xlane.f32.xlu0 %v2042
  %v2044 = vpop.xlane.xlu0 %2043
  %v2045 = vsel %vm430, %v1761, 0.0
  %2046 = vadd.xlane.f32.xlu0 %v2045
  %v2047 = vpop.xlane.xlu0 %2046
  %v2048 = vsel %vm430, %v1762, 0.0
  %2049 = vadd.xlane.f32.xlu0 %v2048
  %v2050 = vpop.xlane.xlu0 %2049
  %v2051 = vsel %vm430, %v1763, 0.0
  %2052 = vadd.xlane.f32.xlu0 %v2051
  %v2053 = vpop.xlane.xlu0 %2052
  %v2054 = vsel %vm430, %v1764, 0.0
  %2055 = vadd.xlane.f32.xlu0 %v2054
  %v2056 = vpop.xlane.xlu0 %2055
  %v2057 = vsel %vm430, %v1765, 0.0
  %2058 = vadd.xlane.f32.xlu0 %v2057
  %v2059 = vpop.xlane.xlu0 %2058
  %v2060 = vsel %vm430, %v1766, 0.0
  %2061 = vadd.xlane.f32.xlu0 %v2060
  %v2062 = vpop.xlane.xlu0 %2061
  %v2063 = vsel %vm430, %v1767, 0.0
  %2064 = vadd.xlane.f32.xlu0 %v2063
  %v2065 = vpop.xlane.xlu0 %2064
  %v2066 = vsel %vm430, %v1768, 0.0
  %2067 = vadd.xlane.f32.xlu0 %v2066
  %v2068 = vpop.xlane.xlu0 %2067
  %v2069 = vsel %vm430, %v1769, 0.0
  %2070 = vadd.xlane.f32.xlu0 %v2069
  %v2071 = vpop.xlane.xlu0 %2070
  %v2072 = vsel %vm430, %v1770, 0.0
  %2073 = vadd.xlane.f32.xlu0 %v2072
  %v2074 = vpop.xlane.xlu0 %2073
  %v2075 = vsel %vm430, %v1771, 0.0
  %2076 = vadd.xlane.f32.xlu0 %v2075
  %v2077 = vpop.xlane.xlu0 %2076
  %v2078 = vsel %vm430, %v1772, 0.0
  %2079 = vadd.xlane.f32.xlu0 %v2078
  %v2080 = vpop.xlane.xlu0 %2079
  %v2081 = vsel %vm430, %v1773, 0.0
  %2082 = vadd.xlane.f32.xlu0 %v2081
  %v2083 = vpop.xlane.xlu0 %2082
  %v2084 = vsel %vm430, %v1774, 0.0
  %2085 = vadd.xlane.f32.xlu0 %v2084
  %v2086 = vpop.xlane.xlu0 %2085
  %v2087 = vsel %vm430, %v1775, 0.0
  %2088 = vadd.xlane.f32.xlu0 %v2087
  %v2089 = vpop.xlane.xlu0 %2088
  %v2090 = vsel %vm430, %v1776, 0.0
  %2091 = vadd.xlane.f32.xlu0 %v2090
  %v2092 = vpop.xlane.xlu0 %2091
  %v2093 = vsel %vm430, %v1777, 0.0
  %2094 = vadd.xlane.f32.xlu0 %v2093
  %v2095 = vpop.xlane.xlu0 %2094
  %v2096 = vsel %vm430, %v1778, 0.0
  %2097 = vadd.xlane.f32.xlu0 %v2096
  %v2098 = vpop.xlane.xlu0 %2097
  %v2099 = vsel %vm430, %v1779, 0.0
  %2100 = vadd.xlane.f32.xlu0 %v2099
  %v2101 = vpop.xlane.xlu0 %2100
  %v2102 = vsel %vm430, %v1780, 0.0
  %2103 = vadd.xlane.f32.xlu0 %v2102
  %v2104 = vpop.xlane.xlu0 %2103
  %v2105 = vsel %vm430, %v1781, 0.0
  %2106 = vadd.xlane.f32.xlu0 %v2105
  %v2107 = vpop.xlane.xlu0 %2106
  %v2108 = vsel %vm430, %v1782, 0.0
  %2109 = vadd.xlane.f32.xlu0 %v2108
  %v2110 = vpop.xlane.xlu0 %2109
  %v2111 = vsel %vm430, %v1783, 0.0
  %2112 = vadd.xlane.f32.xlu0 %v2111
  %v2113 = vpop.xlane.xlu0 %2112
  %v2114 = vsel %vm430, %v1784, 0.0
  %2115 = vadd.xlane.f32.xlu0 %v2114
  %v2116 = vpop.xlane.xlu0 %2115
  %v2117 = vsel %vm430, %v1785, 0.0
  %2118 = vadd.xlane.f32.xlu0 %v2117
  %v2119 = vpop.xlane.xlu0 %2118
  %v2120 = vsel %vm430, %v1786, 0.0
  %2121 = vadd.xlane.f32.xlu0 %v2120
  %v2122 = vpop.xlane.xlu0 %2121
  %v2123 = vsel %vm430, %v1787, 0.0
  %2124 = vadd.xlane.f32.xlu0 %v2123
  %v2125 = vpop.xlane.xlu0 %2124
  %v2126 = vsel %vm430, %v1788, 0.0
  %2127 = vadd.xlane.f32.xlu0 %v2126
  %v2128 = vpop.xlane.xlu0 %2127
  %v2129 = vsel %vm430, %v1789, 0.0
  %2130 = vadd.xlane.f32.xlu0 %v2129
  %v2131 = vpop.xlane.xlu0 %2130
  %v2132 = vsel %vm430, %v1790, 0.0
  %2133 = vadd.xlane.f32.xlu0 %v2132
  %v2134 = vpop.xlane.xlu0 %2133
  %v2135 = vsel %vm430, %v1791, 0.0
  %2136 = vadd.xlane.f32.xlu0 %v2135
  %v2137 = vpop.xlane.xlu0 %2136
  %v2138 = vsel %vm430, %v1792, 0.0
  %2139 = vadd.xlane.f32.xlu0 %v2138
  %v2140 = vpop.xlane.xlu0 %2139
  %v2141 = vsel %vm430, %v1793, 0.0
  %2142 = vadd.xlane.f32.xlu0 %v2141
  %v2143 = vpop.xlane.xlu0 %2142
  %v2144 = vsel %vm430, %v1794, 0.0
  %2145 = vadd.xlane.f32.xlu0 %v2144
  %v2146 = vpop.xlane.xlu0 %2145
  %v2147 = vsel %vm430, %v1795, 0.0
  %2148 = vadd.xlane.f32.xlu0 %v2147
  %v2149 = vpop.xlane.xlu0 %2148
  %v2150 = vsel %vm430, %v1796, 0.0
  %2151 = vadd.xlane.f32.xlu0 %v2150
  %v2152 = vpop.xlane.xlu0 %2151
  %v2153 = vsel %vm430, %v1797, 0.0
  %2154 = vadd.xlane.f32.xlu0 %v2153
  %v2155 = vpop.xlane.xlu0 %2154
  %v2156 = vsel %vm430, %v1798, 0.0
  %2157 = vadd.xlane.f32.xlu0 %v2156
  %v2158 = vpop.xlane.xlu0 %2157
  %v2159 = vsel %vm430, %v1799, 0.0
  %2160 = vadd.xlane.f32.xlu0 %v2159
  %v2161 = vpop.xlane.xlu0 %2160
  %v2162 = vsel %vm430, %v1800, 0.0
  %2163 = vadd.xlane.f32.xlu0 %v2162
  %v2164 = vpop.xlane.xlu0 %2163
  %v2165 = vsel %vm430, %v1801, 0.0
  %2166 = vadd.xlane.f32.xlu0 %v2165
  %v2167 = vpop.xlane.xlu0 %2166
  %v2168 = vsel %vm430, %v1802, 0.0
  %2169 = vadd.xlane.f32.xlu0 %v2168
  %v2170 = vpop.xlane.xlu0 %2169
  %v2171 = vsel %vm430, %v1803, 0.0
  %2172 = vadd.xlane.f32.xlu0 %v2171
  %v2173 = vpop.xlane.xlu0 %2172
  %v2174 = vsel %vm430, %v1804, 0.0
  %2175 = vadd.xlane.f32.xlu0 %v2174
  %v2176 = vpop.xlane.xlu0 %2175
  %v2177 = vsel %vm430, %v1805, 0.0
  %2178 = vadd.xlane.f32.xlu0 %v2177
  %v2179 = vpop.xlane.xlu0 %2178
  %v2180 = vsel %vm430, %v1806, 0.0
  %2181 = vadd.xlane.f32.xlu0 %v2180
  %v2182 = vpop.xlane.xlu0 %2181
  %v2183 = vsel %vm430, %v1807, 0.0
  %2184 = vadd.xlane.f32.xlu0 %v2183
  %v2185 = vpop.xlane.xlu0 %2184
  %v2186 = vsel %vm430, %v1808, 0.0
  %2187 = vadd.xlane.f32.xlu0 %v2186
  %v2188 = vpop.xlane.xlu0 %2187
  %v2189 = vsel %vm430, %v1809, 0.0
  %2190 = vadd.xlane.f32.xlu0 %v2189
  %v2191 = vpop.xlane.xlu0 %2190
  %v2192 = vsel %vm430, %v1810, 0.0
  %2193 = vadd.xlane.f32.xlu0 %v2192
  %v2194 = vpop.xlane.xlu0 %2193
  %v2195 = vsel %vm430, %v1811, 0.0
  %2196 = vadd.xlane.f32.xlu0 %v2195
  %v2197 = vpop.xlane.xlu0 %2196
  %v2198 = vsel %vm430, %v1812, 0.0
  %2199 = vadd.xlane.f32.xlu0 %v2198
  %v2200 = vpop.xlane.xlu0 %2199
  %v2201 = vsel %vm430, %v1813, 0.0
  %2202 = vadd.xlane.f32.xlu0 %v2201
  %v2203 = vpop.xlane.xlu0 %2202
  %v2204 = vsel %vm430, %v1814, 0.0
  %2205 = vadd.xlane.f32.xlu0 %v2204
  %v2206 = vpop.xlane.xlu0 %2205
  %v2207 = vsel %vm430, %v1815, 0.0
  %2208 = vadd.xlane.f32.xlu0 %v2207
  %v2209 = vpop.xlane.xlu0 %2208
  %v2210 = vsel %vm430, %v1816, 0.0
  %2211 = vadd.xlane.f32.xlu0 %v2210
  %v2212 = vpop.xlane.xlu0 %2211
  %v2213 = vsel %vm430, %v1817, 0.0
  %2214 = vadd.xlane.f32.xlu0 %v2213
  %v2215 = vpop.xlane.xlu0 %2214
  %v2216 = vsel %vm430, %v1818, 0.0
  %2217 = vadd.xlane.f32.xlu0 %v2216
  %v2218 = vpop.xlane.xlu0 %2217
  %v2219 = vsel %vm430, %v1819, 0.0
  %2220 = vadd.xlane.f32.xlu0 %v2219
  %v2221 = vpop.xlane.xlu0 %2220
  %v2222 = vsel %vm430, %v1820, 0.0
  %2223 = vadd.xlane.f32.xlu0 %v2222
  %v2224 = vpop.xlane.xlu0 %2223
  %v2225 = vsel %vm430, %v1821, 0.0
  %2226 = vadd.xlane.f32.xlu0 %v2225
  %v2227 = vpop.xlane.xlu0 %2226
  %v2228 = vsel %vm430, %v1822, 0.0
  %2229 = vadd.xlane.f32.xlu0 %v2228
  %v2230 = vpop.xlane.xlu0 %2229
  %v2231 = vsel %vm430, %v1823, 0.0
  %2232 = vadd.xlane.f32.xlu0 %v2231
  %v2233 = vpop.xlane.xlu0 %2232
  %v2234 = vsel %vm430, %v1824, 0.0
  %2235 = vadd.xlane.f32.xlu0 %v2234
  %v2236 = vpop.xlane.xlu0 %2235
  %v2237 = vsel %vm430, %v1825, 0.0
  %2238 = vadd.xlane.f32.xlu0 %v2237
  %v2239 = vpop.xlane.xlu0 %2238
  %v2240 = vsel %vm430, %v1826, 0.0
  %2241 = vadd.xlane.f32.xlu0 %v2240
  %v2242 = vpop.xlane.xlu0 %2241
  %v2243 = vsel %vm430, %v1827, 0.0
  %2244 = vadd.xlane.f32.xlu0 %v2243
  %v2245 = vpop.xlane.xlu0 %2244
  %v2246 = vsel %vm430, %v1828, 0.0
  %2247 = vadd.xlane.f32.xlu0 %v2246
  %v2248 = vpop.xlane.xlu0 %2247
  %v2249 = vsel %vm430, %v1829, 0.0
  %2250 = vadd.xlane.f32.xlu0 %v2249
  %v2251 = vpop.xlane.xlu0 %2250
  %v2252 = vsel %vm430, %v1830, 0.0
  %2253 = vadd.xlane.f32.xlu0 %v2252
  %v2254 = vpop.xlane.xlu0 %2253
  %v2255 = vsel %vm430, %v1831, 0.0
  %2256 = vadd.xlane.f32.xlu0 %v2255
  %v2257 = vpop.xlane.xlu0 %2256
  %v2258 = vsel %vm430, %v1832, 0.0
  %2259 = vadd.xlane.f32.xlu0 %v2258
  %v2260 = vpop.xlane.xlu0 %2259
  %v2261 = vsel %vm430, %v1833, 0.0
  %2262 = vadd.xlane.f32.xlu0 %v2261
  %v2263 = vpop.xlane.xlu0 %2262
  %v2264 = vsel %vm430, %v1834, 0.0
  %2265 = vadd.xlane.f32.xlu0 %v2264
  %v2266 = vpop.xlane.xlu0 %2265
  %v2267 = vsel %vm430, %v1835, 0.0
  %2268 = vadd.xlane.f32.xlu0 %v2267
  %v2269 = vpop.xlane.xlu0 %2268
  %v2270 = vsel %vm430, %v1836, 0.0
  %2271 = vadd.xlane.f32.xlu0 %v2270
  %v2272 = vpop.xlane.xlu0 %2271
  %v2273 = vsel %vm430, %v1837, 0.0
  %2274 = vadd.xlane.f32.xlu0 %v2273
  %v2275 = vpop.xlane.xlu0 %2274
  %v2276 = vsel %vm430, %v1838, 0.0
  %2277 = vadd.xlane.f32.xlu0 %v2276
  %v2278 = vpop.xlane.xlu0 %2277
  %v2279 = vsel %vm430, %v1839, 0.0
  %2280 = vadd.xlane.f32.xlu0 %v2279
  %v2281 = vpop.xlane.xlu0 %2280
  %v2282 = vsel %vm430, %v1840, 0.0
  %2283 = vadd.xlane.f32.xlu0 %v2282
  %v2284 = vpop.xlane.xlu0 %2283
  %v2285 = vsel %vm430, %v1841, 0.0
  %2286 = vadd.xlane.f32.xlu0 %v2285
  %v2287 = vpop.xlane.xlu0 %2286
  %v2288 = vsel %vm430, %v1842, 0.0
  %2289 = vadd.xlane.f32.xlu0 %v2288
  %v2290 = vpop.xlane.xlu0 %2289
  %v2291 = vsel %vm430, %v1843, 0.0
  %2292 = vadd.xlane.f32.xlu0 %v2291
  %v2293 = vpop.xlane.xlu0 %2292
  %v2294 = vsel %vm430, %v1844, 0.0
  %2295 = vadd.xlane.f32.xlu0 %v2294
  %v2296 = vpop.xlane.xlu0 %2295
  %v2297 = vsel %vm430, %v1845, 0.0
  %2298 = vadd.xlane.f32.xlu0 %v2297
  %v2299 = vpop.xlane.xlu0 %2298
  %v2300 = vsel %vm430, %v1846, 0.0
  %2301 = vadd.xlane.f32.xlu0 %v2300
  %v2302 = vpop.xlane.xlu0 %2301
  %v2303 = vsel %vm430, %v1847, 0.0
  %2304 = vadd.xlane.f32.xlu0 %v2303
  %v2305 = vpop.xlane.xlu0 %2304
  %v2306 = vsel %vm430, %v1848, 0.0
  %2307 = vadd.xlane.f32.xlu0 %v2306
  %v2308 = vpop.xlane.xlu0 %2307
  %v2309 = vsel %vm430, %v1849, 0.0
  %2310 = vadd.xlane.f32.xlu0 %v2309
  %v2311 = vpop.xlane.xlu0 %2310
  %v2312 = vsel %vm430, %v1850, 0.0
  %2313 = vadd.xlane.f32.xlu0 %v2312
  %v2314 = vpop.xlane.xlu0 %2313
  %v2315 = vsel %vm430, %v1851, 0.0
  %2316 = vadd.xlane.f32.xlu0 %v2315
  %v2317 = vpop.xlane.xlu0 %2316
  %v2318 = vsel %vm430, %v1852, 0.0
  %2319 = vadd.xlane.f32.xlu0 %v2318
  %v2320 = vpop.xlane.xlu0 %2319
  %v2321 = vsel %vm430, %v1853, 0.0
  %2322 = vadd.xlane.f32.xlu0 %v2321
  %v2323 = vpop.xlane.xlu0 %2322
  %v2324 = vsel %vm430, %v1854, 0.0
  %2325 = vadd.xlane.f32.xlu0 %v2324
  %v2326 = vpop.xlane.xlu0 %2325
  %v2327 = vsel %vm430, %v1855, 0.0
  %2328 = vadd.xlane.f32.xlu0 %v2327
  %v2329 = vpop.xlane.xlu0 %2328
  %v2330 = vsel %vm430, %v1856, 0.0
  %2331 = vadd.xlane.f32.xlu0 %v2330
  %v2332 = vpop.xlane.xlu0 %2331
  %v2333 = vsel %vm430, %v1857, 0.0
  %2334 = vadd.xlane.f32.xlu0 %v2333
  %v2335 = vpop.xlane.xlu0 %2334
  %v2336 = vsel %vm430, %v1858, 0.0
  %2337 = vadd.xlane.f32.xlu0 %v2336
  %v2338 = vpop.xlane.xlu0 %2337
  %v2339 = vsel %vm430, %v1859, 0.0
  %2340 = vadd.xlane.f32.xlu0 %v2339
  %v2341 = vpop.xlane.xlu0 %2340
  %v2342 = vsel %vm430, %v1860, 0.0
  %2343 = vadd.xlane.f32.xlu0 %v2342
  %v2344 = vpop.xlane.xlu0 %2343
  %v2345 = vsel %vm430, %v1861, 0.0
  %2346 = vadd.xlane.f32.xlu0 %v2345
  %v2347 = vpop.xlane.xlu0 %2346
  %v2348 = vsel %vm430, %v1862, 0.0
  %2349 = vadd.xlane.f32.xlu0 %v2348
  %v2350 = vpop.xlane.xlu0 %2349
  %v2351 = vsel %vm430, %v1863, 0.0
  %2352 = vadd.xlane.f32.xlu0 %v2351
  %v2353 = vpop.xlane.xlu0 %2352
  %v2354 = vsel %vm430, %v1864, 0.0
  %2355 = vadd.xlane.f32.xlu0 %v2354
  %v2356 = vpop.xlane.xlu0 %2355
  %v2357 = vsel %vm430, %v1865, 0.0
  %2358 = vadd.xlane.f32.xlu0 %v2357
  %v2359 = vpop.xlane.xlu0 %2358
  %v2360 = vsel %vm430, %v1866, 0.0
  %2361 = vadd.xlane.f32.xlu0 %v2360
  %v2362 = vpop.xlane.xlu0 %2361
  %v2363 = vsel %vm430, %v1867, 0.0
  %2364 = vadd.xlane.f32.xlu0 %v2363
  %v2365 = vpop.xlane.xlu0 %2364
  %v2366 = vsel %vm430, %v1868, 0.0
  %2367 = vadd.xlane.f32.xlu0 %v2366
  %v2368 = vpop.xlane.xlu0 %2367
  %v2369 = vsel %vm430, %v1869, 0.0
  %2370 = vadd.xlane.f32.xlu0 %v2369
  %v2371 = vpop.xlane.xlu0 %2370
  %v2372 = vsel %vm430, %v1870, 0.0
  %2373 = vadd.xlane.f32.xlu0 %v2372
  %v2374 = vpop.xlane.xlu0 %2373
  %v2375 = vsel %vm430, %v1871, 0.0
  %2376 = vadd.xlane.f32.xlu0 %v2375
  %v2377 = vpop.xlane.xlu0 %2376
  %v2378 = vsel %vm430, %v1872, 0.0
  %2379 = vadd.xlane.f32.xlu0 %v2378
  %v2380 = vpop.xlane.xlu0 %2379
  %v2381 = vsel %vm430, %v1873, 0.0
  %2382 = vadd.xlane.f32.xlu0 %v2381
  %v2383 = vpop.xlane.xlu0 %2382
  %v2384 = vsel %vm430, %v1874, 0.0
  %2385 = vadd.xlane.f32.xlu0 %v2384
  %v2386 = vpop.xlane.xlu0 %2385
  %v2387 = vsel %vm430, %v1875, 0.0
  %2388 = vadd.xlane.f32.xlu0 %v2387
  %v2389 = vpop.xlane.xlu0 %2388
  %v2390 = vsel %vm430, %v1876, 0.0
  %2391 = vadd.xlane.f32.xlu0 %v2390
  %v2392 = vpop.xlane.xlu0 %2391
  %v2393 = vsel %vm430, %v1877, 0.0
  %2394 = vadd.xlane.f32.xlu0 %v2393
  %v2395 = vpop.xlane.xlu0 %2394
  %v2396 = vsel %vm430, %v1878, 0.0
  %2397 = vadd.xlane.f32.xlu0 %v2396
  %v2398 = vpop.xlane.xlu0 %2397
  %v2399 = vsel %vm430, %v1879, 0.0
  %2400 = vadd.xlane.f32.xlu0 %v2399
  %v2401 = vpop.xlane.xlu0 %2400
  %v2402 = vsel %vm430, %v1880, 0.0
  %2403 = vadd.xlane.f32.xlu0 %v2402
  %v2404 = vpop.xlane.xlu0 %2403
  %v2405 = vsel %vm430, %v1881, 0.0
  %2406 = vadd.xlane.f32.xlu0 %v2405
  %v2407 = vpop.xlane.xlu0 %2406
  %v2408 = vsel %vm430, %v1882, 0.0
  %2409 = vadd.xlane.f32.xlu0 %v2408
  %v2410 = vpop.xlane.xlu0 %2409
  %v2411 = vsel %vm430, %v1883, 0.0
  %2412 = vadd.xlane.f32.xlu0 %v2411
  %v2413 = vpop.xlane.xlu0 %2412
  %v2414 = vsel %vm430, %v1884, 0.0
  %2415 = vadd.xlane.f32.xlu0 %v2414
  %v2416 = vpop.xlane.xlu0 %2415
  %v2417 = vsel %vm430, %v1885, 0.0
  %2418 = vadd.xlane.f32.xlu0 %v2417
  %v2419 = vpop.xlane.xlu0 %2418
  %v2420 = vsel %vm430, %v1886, 0.0
  %2421 = vadd.xlane.f32.xlu0 %v2420
  %v2422 = vpop.xlane.xlu0 %2421
  %v2423 = vsel %vm430, %v1887, 0.0
  %2424 = vadd.xlane.f32.xlu0 %v2423
  %v2425 = vpop.xlane.xlu0 %2424
  %v2426 = vsel %vm430, %v1888, 0.0
  %2427 = vadd.xlane.f32.xlu0 %v2426
  %v2428 = vpop.xlane.xlu0 %2427
  %v2429 = vsel %vm430, %v1889, 0.0
  %2430 = vadd.xlane.f32.xlu0 %v2429
  %v2431 = vpop.xlane.xlu0 %2430
  %v2432 = vsel %vm430, %v1890, 0.0
  %2433 = vadd.xlane.f32.xlu0 %v2432
  %v2434 = vpop.xlane.xlu0 %2433
  %v2435 = vsel %vm430, %v1891, 0.0
  %2436 = vadd.xlane.f32.xlu0 %v2435
  %v2437 = vpop.xlane.xlu0 %2436
  %v2438 = vsel %vm430, %v1892, 0.0
  %2439 = vadd.xlane.f32.xlu0 %v2438
  %v2440 = vpop.xlane.xlu0 %2439
  %v2441 = vsel %vm430, %v1893, 0.0
  %2442 = vadd.xlane.f32.xlu0 %v2441
  %v2443 = vpop.xlane.xlu0 %2442
  %v2444 = vsel %vm430, %v1894, 0.0
  %2445 = vadd.xlane.f32.xlu0 %v2444
  %v2446 = vpop.xlane.xlu0 %2445
  %v2447 = vsel %vm430, %v1895, 0.0
  %2448 = vadd.xlane.f32.xlu0 %v2447
  %v2449 = vpop.xlane.xlu0 %2448
  %v2450 = vsel %vm430, %v1896, 0.0
  %2451 = vadd.xlane.f32.xlu0 %v2450
  %v2452 = vpop.xlane.xlu0 %2451
  %v2453 = vsel %vm430, %v1897, 0.0
  %2454 = vadd.xlane.f32.xlu0 %v2453
  %v2455 = vpop.xlane.xlu0 %2454
  %v2456 = vsel %vm430, %v1898, 0.0
  %2457 = vadd.xlane.f32.xlu0 %v2456
  %v2458 = vpop.xlane.xlu0 %2457
  %v2459 = vsel %vm430, %v1899, 0.0
  %2460 = vadd.xlane.f32.xlu0 %v2459
  %v2461 = vpop.xlane.xlu0 %2460
  %v2462 = vsel %vm430, %v1900, 0.0
  %2463 = vadd.xlane.f32.xlu0 %v2462
  %v2464 = vpop.xlane.xlu0 %2463
  %v2465 = vsel %vm430, %v1901, 0.0
  %2466 = vadd.xlane.f32.xlu0 %v2465
  %v2467 = vpop.xlane.xlu0 %2466
  %v2468 = vsel %vm430, %v1902, 0.0
  %2469 = vadd.xlane.f32.xlu0 %v2468
  %v2470 = vpop.xlane.xlu0 %2469
  %v2471 = vsel %vm430, %v1903, 0.0
  %2472 = vadd.xlane.f32.xlu0 %v2471
  %v2473 = vpop.xlane.xlu0 %2472
  %v2474 = vsel %vm430, %v1904, 0.0
  %2475 = vadd.xlane.f32.xlu0 %v2474
  %v2476 = vpop.xlane.xlu0 %2475
  %v2477 = vsel %vm430, %v1905, 0.0
  %2478 = vadd.xlane.f32.xlu0 %v2477
  %v2479 = vpop.xlane.xlu0 %2478
  %v2480 = vsel %vm430, %v1906, 0.0
  %2481 = vadd.xlane.f32.xlu0 %v2480
  %v2482 = vpop.xlane.xlu0 %2481
  %v2483 = vsel %vm430, %v1907, 0.0
  %2484 = vadd.xlane.f32.xlu0 %v2483
  %v2485 = vpop.xlane.xlu0 %2484
  %v2486 = vsel %vm430, %v1908, 0.0
  %2487 = vadd.xlane.f32.xlu0 %v2486
  %v2488 = vpop.xlane.xlu0 %2487
  %v2489 = vsel %vm430, %v1909, 0.0
  %2490 = vadd.xlane.f32.xlu0 %v2489
  %v2491 = vpop.xlane.xlu0 %2490
  %v2492 = vsel %vm430, %v1910, 0.0
  %2493 = vadd.xlane.f32.xlu0 %v2492
  %v2494 = vpop.xlane.xlu0 %2493
  %v2495 = vsel %vm430, %v1911, 0.0
  %2496 = vadd.xlane.f32.xlu0 %v2495
  %v2497 = vpop.xlane.xlu0 %2496
  %v2498 = vsel %vm430, %v1912, 0.0
  %2499 = vadd.xlane.f32.xlu0 %v2498
  %v2500 = vpop.xlane.xlu0 %2499
  %v2501 = vsel %vm430, %v1913, 0.0
  %2502 = vadd.xlane.f32.xlu0 %v2501
  %v2503 = vpop.xlane.xlu0 %2502
  %v2504 = vsel %vm430, %v1914, 0.0
  %2505 = vadd.xlane.f32.xlu0 %v2504
  %v2506 = vpop.xlane.xlu0 %2505
  %v2507 = vsel %vm430, %v1915, 0.0
  %2508 = vadd.xlane.f32.xlu0 %v2507
  %v2509 = vpop.xlane.xlu0 %2508
  %v2510 = vsel %vm430, %v1916, 0.0
  %2511 = vadd.xlane.f32.xlu0 %v2510
  %v2512 = vpop.xlane.xlu0 %2511
  %v2513 = vsel %vm430, %v1917, 0.0
  %2514 = vadd.xlane.f32.xlu0 %v2513
  %v2515 = vpop.xlane.xlu0 %2514
  %v2516 = vsel %vm430, %v1918, 0.0
  %2517 = vadd.xlane.f32.xlu0 %v2516
  %v2518 = vpop.xlane.xlu0 %2517
  %v2519 = vsel %vm430, %v1919, 0.0
  %2520 = vadd.xlane.f32.xlu0 %v2519
  %v2521 = vpop.xlane.xlu0 %2520
  %v2522 = vsel %vm430, %v1920, 0.0
  %2523 = vadd.xlane.f32.xlu0 %v2522
  %v2524 = vpop.xlane.xlu0 %2523
  %v2525 = vsel %vm430, %v1921, 0.0
  %2526 = vadd.xlane.f32.xlu0 %v2525
  %v2527 = vpop.xlane.xlu0 %2526
  %v2528 = vsel %vm430, %v1922, 0.0
  %2529 = vadd.xlane.f32.xlu0 %v2528
  %v2530 = vpop.xlane.xlu0 %2529
  %v2531 = vsel %vm430, %v1923, 0.0
  %2532 = vadd.xlane.f32.xlu0 %v2531
  %v2533 = vpop.xlane.xlu0 %2532
  %v2534 = vsel %vm430, %v1924, 0.0
  %2535 = vadd.xlane.f32.xlu0 %v2534
  %v2536 = vpop.xlane.xlu0 %2535
  %v2537 = vsel %vm430, %v1925, 0.0
  %2538 = vadd.xlane.f32.xlu0 %v2537
  %v2539 = vpop.xlane.xlu0 %2538
  %v2540 = vsel %vm430, %v1926, 0.0
  %2541 = vadd.xlane.f32.xlu0 %v2540
  %v2542 = vpop.xlane.xlu0 %2541
  %v2543 = vsel %vm430, %v1927, 0.0
  %2544 = vadd.xlane.f32.xlu0 %v2543
  %v2545 = vpop.xlane.xlu0 %2544
  %v2546 = vsel %vm430, %v1928, 0.0
  %2547 = vadd.xlane.f32.xlu0 %v2546
  %v2548 = vpop.xlane.xlu0 %2547
  %v2549 = vsel %vm430, %v1929, 0.0
  %2550 = vadd.xlane.f32.xlu0 %v2549
  %v2551 = vpop.xlane.xlu0 %2550
  %v2552 = vsel %vm430, %v1930, 0.0
  %2553 = vadd.xlane.f32.xlu0 %v2552
  %v2554 = vpop.xlane.xlu0 %2553
  %v2763 = vperm.slane %v1933, %v1264
  %v2764 = vperm.slane %v1936, %v1266
  %v2765 = vsel %vm1268, %v2764, %v2763
  %v2766 = vperm.slane %v1939, %v1270
  %v2767 = vsel %vm1272, %v2766, %v2765
  %v2768 = vperm.slane %v1942, %v1274
  %v2769 = vsel %vm1276, %v2768, %v2767
  %v2770 = vperm.slane %v1945, %v1278
  %v2771 = vsel %vm1280, %v2770, %v2769
  %v2772 = vperm.slane %v1948, %v1282
  %v2773 = vsel %vm1284, %v2772, %v2771
  %v2774 = vperm.slane %v1951, %v1286
  %v2775 = vsel %vm1288, %v2774, %v2773
  %v2776 = vperm.slane %v1954, %v1290
  %v2777 = vsel %vm1292, %v2776, %v2775
  %v2778 = vperm.slane %v1957, %v1294
  %v2779 = vsel %vm1296, %v2778, %v2777
  %v2780 = vperm.slane %v1960, %v1298
  %v2781 = vsel %vm1300, %v2780, %v2779
  %v2782 = vperm.slane %v1963, %v1302
  %v2783 = vsel %vm1304, %v2782, %v2781
  %v2784 = vperm.slane %v1966, %v1306
  %v2785 = vsel %vm1308, %v2784, %v2783
  %v2786 = vperm.slane %v1969, %v1310
  %v2787 = vsel %vm1312, %v2786, %v2785
  %v2788 = vperm.slane %v1972, %v1314
  %v2789 = vsel %vm1316, %v2788, %v2787
  %v2790 = vperm.slane %v1975, %v1318
  %v2791 = vsel %vm1320, %v2790, %v2789
  %v2792 = vperm.slane %v1978, %v1322
  %v2793 = vsel %vm1324, %v2792, %v2791
  %v2794 = vperm.slane %v1981, %v1264
  %v2795 = vperm.slane %v1984, %v1266
  %v2796 = vsel %vm1268, %v2795, %v2794
  %v2797 = vperm.slane %v1987, %v1270
  %v2798 = vsel %vm1272, %v2797, %v2796
  %v2799 = vperm.slane %v1990, %v1274
  %v2800 = vsel %vm1276, %v2799, %v2798
  %v2801 = vperm.slane %v1993, %v1278
  %v2802 = vsel %vm1280, %v2801, %v2800
  %v2803 = vperm.slane %v1996, %v1282
  %v2804 = vsel %vm1284, %v2803, %v2802
  %v2805 = vperm.slane %v1999, %v1286
  %v2806 = vsel %vm1288, %v2805, %v2804
  %v2807 = vperm.slane %v2002, %v1290
  %v2808 = vsel %vm1292, %v2807, %v2806
  %v2809 = vperm.slane %v2005, %v1294
  %v2810 = vsel %vm1296, %v2809, %v2808
  %v2811 = vperm.slane %v2008, %v1298
  %v2812 = vsel %vm1300, %v2811, %v2810
  %v2813 = vperm.slane %v2011, %v1302
  %v2814 = vsel %vm1304, %v2813, %v2812
  %v2815 = vperm.slane %v2014, %v1306
  %v2816 = vsel %vm1308, %v2815, %v2814
  %v2817 = vperm.slane %v2017, %v1310
  %v2818 = vsel %vm1312, %v2817, %v2816
  %v2819 = vperm.slane %v2020, %v1314
  %v2820 = vsel %vm1316, %v2819, %v2818
  %v2821 = vperm.slane %v2023, %v1318
  %v2822 = vsel %vm1320, %v2821, %v2820
  %v2823 = vperm.slane %v2026, %v1322
  %v2824 = vsel %vm1324, %v2823, %v2822
  %v2825 = vperm.slane %v2029, %v1264
  %v2826 = vperm.slane %v2032, %v1266
  %v2827 = vsel %vm1268, %v2826, %v2825
  %v2828 = vperm.slane %v2035, %v1270
  %v2829 = vsel %vm1272, %v2828, %v2827
  %v2830 = vperm.slane %v2038, %v1274
  %v2831 = vsel %vm1276, %v2830, %v2829
  %v2832 = vperm.slane %v2041, %v1278
  %v2833 = vsel %vm1280, %v2832, %v2831
  %v2834 = vperm.slane %v2044, %v1282
  %v2835 = vsel %vm1284, %v2834, %v2833
  %v2836 = vperm.slane %v2047, %v1286
  %v2837 = vsel %vm1288, %v2836, %v2835
  %v2838 = vperm.slane %v2050, %v1290
  %v2839 = vsel %vm1292, %v2838, %v2837
  %v2840 = vperm.slane %v2053, %v1294
  %v2841 = vsel %vm1296, %v2840, %v2839
  %v2842 = vperm.slane %v2056, %v1298
  %v2843 = vsel %vm1300, %v2842, %v2841
  %v2844 = vperm.slane %v2059, %v1302
  %v2845 = vsel %vm1304, %v2844, %v2843
  %v2846 = vperm.slane %v2062, %v1306
  %v2847 = vsel %vm1308, %v2846, %v2845
  %v2848 = vperm.slane %v2065, %v1310
  %v2849 = vsel %vm1312, %v2848, %v2847
  %v2850 = vperm.slane %v2068, %v1314
  %v2851 = vsel %vm1316, %v2850, %v2849
  %v2852 = vperm.slane %v2071, %v1318
  %v2853 = vsel %vm1320, %v2852, %v2851
  %v2854 = vperm.slane %v2074, %v1322
  %v2855 = vsel %vm1324, %v2854, %v2853
  %v2856 = vperm.slane %v2077, %v1264
  %v2857 = vperm.slane %v2080, %v1266
  %v2858 = vsel %vm1268, %v2857, %v2856
  %v2859 = vperm.slane %v2083, %v1270
  %v2860 = vsel %vm1272, %v2859, %v2858
  %v2861 = vperm.slane %v2086, %v1274
  %v2862 = vsel %vm1276, %v2861, %v2860
  %v2863 = vperm.slane %v2089, %v1278
  %v2864 = vsel %vm1280, %v2863, %v2862
  %v2865 = vperm.slane %v2092, %v1282
  %v2866 = vsel %vm1284, %v2865, %v2864
  %v2867 = vperm.slane %v2095, %v1286
  %v2868 = vsel %vm1288, %v2867, %v2866
  %v2869 = vperm.slane %v2098, %v1290
  %v2870 = vsel %vm1292, %v2869, %v2868
  %v2871 = vperm.slane %v2101, %v1294
  %v2872 = vsel %vm1296, %v2871, %v2870
  %v2873 = vperm.slane %v2104, %v1298
  %v2874 = vsel %vm1300, %v2873, %v2872
  %v2875 = vperm.slane %v2107, %v1302
  %v2876 = vsel %vm1304, %v2875, %v2874
  %v2877 = vperm.slane %v2110, %v1306
  %v2878 = vsel %vm1308, %v2877, %v2876
  %v2879 = vperm.slane %v2113, %v1310
  %v2880 = vsel %vm1312, %v2879, %v2878
  %v2881 = vperm.slane %v2116, %v1314
  %v2882 = vsel %vm1316, %v2881, %v2880
  %v2883 = vperm.slane %v2119, %v1318
  %v2884 = vsel %vm1320, %v2883, %v2882
  %v2885 = vperm.slane %v2122, %v1322
  %v2886 = vsel %vm1324, %v2885, %v2884
  %v2887 = vperm.slane %v2125, %v1264
  %v2888 = vperm.slane %v2128, %v1266
  %v2889 = vsel %vm1268, %v2888, %v2887
  %v2890 = vperm.slane %v2131, %v1270
  %v2891 = vsel %vm1272, %v2890, %v2889
  %v2892 = vperm.slane %v2134, %v1274
  %v2893 = vsel %vm1276, %v2892, %v2891
  %v2894 = vperm.slane %v2137, %v1278
  %v2895 = vsel %vm1280, %v2894, %v2893
  %v2896 = vperm.slane %v2140, %v1282
  %v2897 = vsel %vm1284, %v2896, %v2895
  %v2898 = vperm.slane %v2143, %v1286
  %v2899 = vsel %vm1288, %v2898, %v2897
  %v2900 = vperm.slane %v2146, %v1290
  %v2901 = vsel %vm1292, %v2900, %v2899
  %v2902 = vperm.slane %v2149, %v1294
  %v2903 = vsel %vm1296, %v2902, %v2901
  %v2904 = vperm.slane %v2152, %v1298
  %v2905 = vsel %vm1300, %v2904, %v2903
  %v2906 = vperm.slane %v2155, %v1302
  %v2907 = vsel %vm1304, %v2906, %v2905
  %v2908 = vperm.slane %v2158, %v1306
  %v2909 = vsel %vm1308, %v2908, %v2907
  %v2910 = vperm.slane %v2161, %v1310
  %v2911 = vsel %vm1312, %v2910, %v2909
  %v2912 = vperm.slane %v2164, %v1314
  %v2913 = vsel %vm1316, %v2912, %v2911
  %v2914 = vperm.slane %v2167, %v1318
  %v2915 = vsel %vm1320, %v2914, %v2913
  %v2916 = vperm.slane %v2170, %v1322
  %v2917 = vsel %vm1324, %v2916, %v2915
  %v2918 = vperm.slane %v2173, %v1264
  %v2919 = vperm.slane %v2176, %v1266
  %v2920 = vsel %vm1268, %v2919, %v2918
  %v2921 = vperm.slane %v2179, %v1270
  %v2922 = vsel %vm1272, %v2921, %v2920
  %v2923 = vperm.slane %v2182, %v1274
  %v2924 = vsel %vm1276, %v2923, %v2922
  %v2925 = vperm.slane %v2185, %v1278
  %v2926 = vsel %vm1280, %v2925, %v2924
  %v2927 = vperm.slane %v2188, %v1282
  %v2928 = vsel %vm1284, %v2927, %v2926
  %v2929 = vperm.slane %v2191, %v1286
  %v2930 = vsel %vm1288, %v2929, %v2928
  %v2931 = vperm.slane %v2194, %v1290
  %v2932 = vsel %vm1292, %v2931, %v2930
  %v2933 = vperm.slane %v2197, %v1294
  %v2934 = vsel %vm1296, %v2933, %v2932
  %v2935 = vperm.slane %v2200, %v1298
  %v2936 = vsel %vm1300, %v2935, %v2934
  %v2937 = vperm.slane %v2203, %v1302
  %v2938 = vsel %vm1304, %v2937, %v2936
  %v2939 = vperm.slane %v2206, %v1306
  %v2940 = vsel %vm1308, %v2939, %v2938
  %v2941 = vperm.slane %v2209, %v1310
  %v2942 = vsel %vm1312, %v2941, %v2940
  %v2943 = vperm.slane %v2212, %v1314
  %v2944 = vsel %vm1316, %v2943, %v2942
  %v2945 = vperm.slane %v2215, %v1318
  %v2946 = vsel %vm1320, %v2945, %v2944
  %v2947 = vperm.slane %v2218, %v1322
  %v2948 = vsel %vm1324, %v2947, %v2946
  %v2949 = vperm.slane %v2221, %v1264
  %v2950 = vperm.slane %v2224, %v1266
  %v2951 = vsel %vm1268, %v2950, %v2949
  %v2952 = vperm.slane %v2227, %v1270
  %v2953 = vsel %vm1272, %v2952, %v2951
  %v2954 = vperm.slane %v2230, %v1274
  %v2955 = vsel %vm1276, %v2954, %v2953
  %v2956 = vperm.slane %v2233, %v1278
  %v2957 = vsel %vm1280, %v2956, %v2955
  %v2958 = vperm.slane %v2236, %v1282
  %v2959 = vsel %vm1284, %v2958, %v2957
  %v2960 = vperm.slane %v2239, %v1286
  %v2961 = vsel %vm1288, %v2960, %v2959
  %v2962 = vperm.slane %v2242, %v1290
  %v2963 = vsel %vm1292, %v2962, %v2961
  %v2964 = vperm.slane %v2245, %v1294
  %v2965 = vsel %vm1296, %v2964, %v2963
  %v2966 = vperm.slane %v2248, %v1298
  %v2967 = vsel %vm1300, %v2966, %v2965
  %v2968 = vperm.slane %v2251, %v1302
  %v2969 = vsel %vm1304, %v2968, %v2967
  %v2970 = vperm.slane %v2254, %v1306
  %v2971 = vsel %vm1308, %v2970, %v2969
  %v2972 = vperm.slane %v2257, %v1310
  %v2973 = vsel %vm1312, %v2972, %v2971
  %v2974 = vperm.slane %v2260, %v1314
  %v2975 = vsel %vm1316, %v2974, %v2973
  %v2976 = vperm.slane %v2263, %v1318
  %v2977 = vsel %vm1320, %v2976, %v2975
  %v2978 = vperm.slane %v2266, %v1322
  %v2979 = vsel %vm1324, %v2978, %v2977
  %v2980 = vperm.slane %v2269, %v1264
  %v2981 = vperm.slane %v2272, %v1266
  %v2982 = vsel %vm1268, %v2981, %v2980
  %v2983 = vperm.slane %v2275, %v1270
  %v2984 = vsel %vm1272, %v2983, %v2982
  %v2985 = vperm.slane %v2278, %v1274
  %v2986 = vsel %vm1276, %v2985, %v2984
  %v2987 = vperm.slane %v2281, %v1278
  %v2988 = vsel %vm1280, %v2987, %v2986
  %v2989 = vperm.slane %v2284, %v1282
  %v2990 = vsel %vm1284, %v2989, %v2988
  %v2991 = vperm.slane %v2287, %v1286
  %v2992 = vsel %vm1288, %v2991, %v2990
  %v2993 = vperm.slane %v2290, %v1290
  %v2994 = vsel %vm1292, %v2993, %v2992
  %v2995 = vperm.slane %v2293, %v1294
  %v2996 = vsel %vm1296, %v2995, %v2994
  %v2997 = vperm.slane %v2296, %v1298
  %v2998 = vsel %vm1300, %v2997, %v2996
  %v2999 = vperm.slane %v2299, %v1302
  %v3000 = vsel %vm1304, %v2999, %v2998
  %v3001 = vperm.slane %v2302, %v1306
  %v3002 = vsel %vm1308, %v3001, %v3000
  %v3003 = vperm.slane %v2305, %v1310
  %v3004 = vsel %vm1312, %v3003, %v3002
  %v3005 = vperm.slane %v2308, %v1314
  %v3006 = vsel %vm1316, %v3005, %v3004
  %v3007 = vperm.slane %v2311, %v1318
  %v3008 = vsel %vm1320, %v3007, %v3006
  %v3009 = vperm.slane %v2314, %v1322
  %v3010 = vsel %vm1324, %v3009, %v3008
  %v3011 = vperm.slane %v2317, %v1264
  %v3012 = vperm.slane %v2320, %v1266
  %v3013 = vsel %vm1268, %v3012, %v3011
  %v3014 = vperm.slane %v2323, %v1270
  %v3015 = vsel %vm1272, %v3014, %v3013
  %v3016 = vperm.slane %v2326, %v1274
  %v3017 = vsel %vm1276, %v3016, %v3015
  %v3018 = vperm.slane %v2329, %v1278
  %v3019 = vsel %vm1280, %v3018, %v3017
  %v3020 = vperm.slane %v2332, %v1282
  %v3021 = vsel %vm1284, %v3020, %v3019
  %v3022 = vperm.slane %v2335, %v1286
  %v3023 = vsel %vm1288, %v3022, %v3021
  %v3024 = vperm.slane %v2338, %v1290
  %v3025 = vsel %vm1292, %v3024, %v3023
  %v3026 = vperm.slane %v2341, %v1294
  %v3027 = vsel %vm1296, %v3026, %v3025
  %v3028 = vperm.slane %v2344, %v1298
  %v3029 = vsel %vm1300, %v3028, %v3027
  %v3030 = vperm.slane %v2347, %v1302
  %v3031 = vsel %vm1304, %v3030, %v3029
  %v3032 = vperm.slane %v2350, %v1306
  %v3033 = vsel %vm1308, %v3032, %v3031
  %v3034 = vperm.slane %v2353, %v1310
  %v3035 = vsel %vm1312, %v3034, %v3033
  %v3036 = vperm.slane %v2356, %v1314
  %v3037 = vsel %vm1316, %v3036, %v3035
  %v3038 = vperm.slane %v2359, %v1318
  %v3039 = vsel %vm1320, %v3038, %v3037
  %v3040 = vperm.slane %v2362, %v1322
  %v3041 = vsel %vm1324, %v3040, %v3039
  %v3042 = vperm.slane %v2365, %v1264
  %v3043 = vperm.slane %v2368, %v1266
  %v3044 = vsel %vm1268, %v3043, %v3042
  %v3045 = vperm.slane %v2371, %v1270
  %v3046 = vsel %vm1272, %v3045, %v3044
  %v3047 = vperm.slane %v2374, %v1274
  %v3048 = vsel %vm1276, %v3047, %v3046
  %v3049 = vperm.slane %v2377, %v1278
  %v3050 = vsel %vm1280, %v3049, %v3048
  %v3051 = vperm.slane %v2380, %v1282
  %v3052 = vsel %vm1284, %v3051, %v3050
  %v3053 = vperm.slane %v2383, %v1286
  %v3054 = vsel %vm1288, %v3053, %v3052
  %v3055 = vperm.slane %v2386, %v1290
  %v3056 = vsel %vm1292, %v3055, %v3054
  %v3057 = vperm.slane %v2389, %v1294
  %v3058 = vsel %vm1296, %v3057, %v3056
  %v3059 = vperm.slane %v2392, %v1298
  %v3060 = vsel %vm1300, %v3059, %v3058
  %v3061 = vperm.slane %v2395, %v1302
  %v3062 = vsel %vm1304, %v3061, %v3060
  %v3063 = vperm.slane %v2398, %v1306
  %v3064 = vsel %vm1308, %v3063, %v3062
  %v3065 = vperm.slane %v2401, %v1310
  %v3066 = vsel %vm1312, %v3065, %v3064
  %v3067 = vperm.slane %v2404, %v1314
  %v3068 = vsel %vm1316, %v3067, %v3066
  %v3069 = vperm.slane %v2407, %v1318
  %v3070 = vsel %vm1320, %v3069, %v3068
  %v3071 = vperm.slane %v2410, %v1322
  %v3072 = vsel %vm1324, %v3071, %v3070
  %v3073 = vperm.slane %v2413, %v1264
  %v3074 = vperm.slane %v2416, %v1266
  %v3075 = vsel %vm1268, %v3074, %v3073
  %v3076 = vperm.slane %v2419, %v1270
  %v3077 = vsel %vm1272, %v3076, %v3075
  %v3078 = vperm.slane %v2422, %v1274
  %v3079 = vsel %vm1276, %v3078, %v3077
  %v3080 = vperm.slane %v2425, %v1278
  %v3081 = vsel %vm1280, %v3080, %v3079
  %v3082 = vperm.slane %v2428, %v1282
  %v3083 = vsel %vm1284, %v3082, %v3081
  %v3084 = vperm.slane %v2431, %v1286
  %v3085 = vsel %vm1288, %v3084, %v3083
  %v3086 = vperm.slane %v2434, %v1290
  %v3087 = vsel %vm1292, %v3086, %v3085
  %v3088 = vperm.slane %v2437, %v1294
  %v3089 = vsel %vm1296, %v3088, %v3087
  %v3090 = vperm.slane %v2440, %v1298
  %v3091 = vsel %vm1300, %v3090, %v3089
  %v3092 = vperm.slane %v2443, %v1302
  %v3093 = vsel %vm1304, %v3092, %v3091
  %v3094 = vperm.slane %v2446, %v1306
  %v3095 = vsel %vm1308, %v3094, %v3093
  %v3096 = vperm.slane %v2449, %v1310
  %v3097 = vsel %vm1312, %v3096, %v3095
  %v3098 = vperm.slane %v2452, %v1314
  %v3099 = vsel %vm1316, %v3098, %v3097
  %v3100 = vperm.slane %v2455, %v1318
  %v3101 = vsel %vm1320, %v3100, %v3099
  %v3102 = vperm.slane %v2458, %v1322
  %v3103 = vsel %vm1324, %v3102, %v3101
  %v3104 = vperm.slane %v2461, %v1264
  %v3105 = vperm.slane %v2464, %v1266
  %v3106 = vsel %vm1268, %v3105, %v3104
  %v3107 = vperm.slane %v2467, %v1270
  %v3108 = vsel %vm1272, %v3107, %v3106
  %v3109 = vperm.slane %v2470, %v1274
  %v3110 = vsel %vm1276, %v3109, %v3108
  %v3111 = vperm.slane %v2473, %v1278
  %v3112 = vsel %vm1280, %v3111, %v3110
  %v3113 = vperm.slane %v2476, %v1282
  %v3114 = vsel %vm1284, %v3113, %v3112
  %v3115 = vperm.slane %v2479, %v1286
  %v3116 = vsel %vm1288, %v3115, %v3114
  %v3117 = vperm.slane %v2482, %v1290
  %v3118 = vsel %vm1292, %v3117, %v3116
  %v3119 = vperm.slane %v2485, %v1294
  %v3120 = vsel %vm1296, %v3119, %v3118
  %v3121 = vperm.slane %v2488, %v1298
  %v3122 = vsel %vm1300, %v3121, %v3120
  %v3123 = vperm.slane %v2491, %v1302
  %v3124 = vsel %vm1304, %v3123, %v3122
  %v3125 = vperm.slane %v2494, %v1306
  %v3126 = vsel %vm1308, %v3125, %v3124
  %v3127 = vperm.slane %v2497, %v1310
  %v3128 = vsel %vm1312, %v3127, %v3126
  %v3129 = vperm.slane %v2500, %v1314
  %v3130 = vsel %vm1316, %v3129, %v3128
  %v3131 = vperm.slane %v2503, %v1318
  %v3132 = vsel %vm1320, %v3131, %v3130
  %v3133 = vperm.slane %v2506, %v1322
  %v3134 = vsel %vm1324, %v3133, %v3132
  %v3135 = vperm.slane %v2509, %v1264
  %v3136 = vperm.slane %v2512, %v1266
  %v3137 = vsel %vm1268, %v3136, %v3135
  %v3138 = vperm.slane %v2515, %v1270
  %v3139 = vsel %vm1272, %v3138, %v3137
  %v3140 = vperm.slane %v2518, %v1274
  %v3141 = vsel %vm1276, %v3140, %v3139
  %v3142 = vperm.slane %v2521, %v1278
  %v3143 = vsel %vm1280, %v3142, %v3141
  %v3144 = vperm.slane %v2524, %v1282
  %v3145 = vsel %vm1284, %v3144, %v3143
  %v3146 = vperm.slane %v2527, %v1286
  %v3147 = vsel %vm1288, %v3146, %v3145
  %v3148 = vperm.slane %v2530, %v1290
  %v3149 = vsel %vm1292, %v3148, %v3147
  %v3150 = vperm.slane %v2533, %v1294
  %v3151 = vsel %vm1296, %v3150, %v3149
  %v3152 = vperm.slane %v2536, %v1298
  %v3153 = vsel %vm1300, %v3152, %v3151
  %v3154 = vperm.slane %v2539, %v1302
  %v3155 = vsel %vm1304, %v3154, %v3153
  %v3156 = vperm.slane %v2542, %v1306
  %v3157 = vsel %vm1308, %v3156, %v3155
  %v3158 = vperm.slane %v2545, %v1310
  %v3159 = vsel %vm1312, %v3158, %v3157
  %v3160 = vperm.slane %v2548, %v1314
  %v3161 = vsel %vm1316, %v3160, %v3159
  %v3162 = vperm.slane %v2551, %v1318
  %v3163 = vsel %vm1320, %v3162, %v3161
  %v3164 = vperm.slane %v2554, %v1322
  %v3165 = vsel %vm1324, %v3164, %v3163
  %v3166 = vsel %vm1698, %v2824, %v2793
  %v3167 = vsel %vm1700, %v2855, %v3166
  %v3168 = vsel %vm1702, %v2886, %v3167
  %v3169 = vsel %vm1704, %v2917, %v3168
  %v3170 = vsel %vm1706, %v2948, %v3169
  %v3171 = vsel %vm1708, %v2979, %v3170
  %v3172 = vsel %vm1710, %v3010, %v3171
  %v3173 = vsel %vm1698, %v3072, %v3041
  %v3174 = vsel %vm1700, %v3103, %v3173
  %v3175 = vsel %vm1702, %v3134, %v3174
  %v3176 = vsel %vm1704, %v3165, %v3175
  %3179 = vst [vmem:[%s3] sm:$0xff] %v3172
  %3180 = vst [vmem:[%s3 + $0x8] sm:$0x1f] %v3176
  // Predicated region
  $region10: #{disaster_head.2} parent=0 // pred_check
    _
  $region11: #{disaster_head.2} parent=0 // pred_check_branch
    %3182 = sbr.rel (0) target = $region13
  $region12: #{disaster_head.2} parent=0 // pred_region
    _
  $region13: #{disaster_head.2} parent=0 // pred_fallthru
    _
  // Predicated region
  $region14: #{disaster_head.2} parent=0 // pred_check
    _
  $region15: #{disaster_head.2} parent=0 // pred_check_branch
    %3184 = sbr.rel (0) target = $region17
  $region16: #{disaster_head.2} parent=0 // pred_region
    _
  $region17: #{disaster_head.2} parent=0 // pred_fallthru
    _
  // Predicated region
  $region18: #{disaster_head.2} parent=0 // pred_check
    _
  $region19: #{disaster_head.2} parent=0 // pred_check_branch
    %3186 = sbr.rel (0) target = $region21
  $region20: #{disaster_head.2} parent=0 // pred_region
    _
  $region21: #{disaster_head.2} parent=0 // pred_fallthru
    _
  // Predicated region
  $region22: #{disaster_head.2} parent=0 // pred_check
    _
  $region23: #{disaster_head.2} parent=0 // pred_check_branch
    %3188 = sbr.rel (0) target = $region25
  $region24: #{disaster_head.2} parent=0 // pred_region
    _
  $region25: #{disaster_head.2} parent=0 // pred_fallthru
    _

</llo_original>
